<compile_context>
chip_gen: v5e
topology: v5e:2x2
jax: 0.10.0
libtpu: 0.0.40
codegen_flags: <defaults>
</compile_context>

<pallas_src>
import functools

import jax
import jax.numpy as jnp
from jax.experimental import pallas as pl
from jax.experimental.pallas import tpu as pltpu

KSIZE = 7
PAD = 3  # padding = 3 for kernel_size = 7


def spatial_attention_kernel(w_ref, x_ref, o_ref, sum_ref, max_ref, *, W, C):
    # w_ref   : SMEM f32[2*7*7]   conv weight, flattened (c, ky, kx); c0 = avg, c1 = max
    # x_ref   : VMEM [bt, ct, HW] input tile (lane-dense minor dim = H*W)
    # o_ref   : VMEM [bt, HW]     output tile (middle singleton dim squeezed)
    # sum_ref : VMEM [bt, HW] f32 running channel sum (persists across channel steps)
    # max_ref : VMEM [bt, HW] f32 running channel max
    bt, ct, HW = x_ref.shape
    c_idx = pl.program_id(1)
    n_c = pl.num_programs(1)

    @pl.when(c_idx == 0)
    def _init():
        sum_ref[...] = jnp.zeros((bt, HW), jnp.float32)
        max_ref[...] = jnp.full((bt, HW), -jnp.inf, jnp.float32)

    x = x_ref[...]                                                  # (bt, ct, HW)
    sum_ref[...] += jnp.sum(x, axis=1, dtype=jnp.float32)
    max_ref[...] = jnp.maximum(max_ref[...],
                               jnp.max(x, axis=1).astype(jnp.float32))

    @pl.when(c_idx == n_c - 1)
    def _finalize():
        avg = sum_ref[...] * jnp.float32(1.0 / C)                   # (bt, HW)
        mx = max_ref[...]                                           # (bt, HW)

        # ---- masks: computed once at (1, HW), shared by avg and max planes ----
        lane = jax.lax.broadcasted_iota(jnp.int32, (1, HW), 1)
        if W & (W - 1) == 0:
            col = jnp.bitwise_and(lane, W - 1)
        else:
            col = jax.lax.rem(lane, jnp.int32(W))

        col_masks = {}
        for kx in range(KSIZE):
            dx = kx - PAD
            if dx == 0:
                col_masks[dx] = None
            elif dx > 0:
                col_masks[dx] = col < (W - dx)
            else:
                col_masks[dx] = col >= (-dx)

        row_masks = {}
        for ky in range(KSIZE):
            dy = ky - PAD
            if dy == 0:
                row_masks[dy] = None
            elif dy > 0:
                row_masks[dy] = lane < (HW - dy * W)
            else:
                row_masks[dy] = lane >= (-dy * W)

        def shifted(p, d, mask):
            # q[:, i] = p[:, i + d] if the flat neighbour is valid (mask) else 0.
            # pltpu.roll == jnp.roll: a single XLU lane rotate (slot idle here).
            if d == 0:
                return p
            q = pltpu.roll(p, shift=(-d) % HW, axis=1)
            return jnp.where(mask, q, jnp.float32(0.0))

        # ---- hoisted SMEM weight scalar reads (once per invocation) ----
        w_avg = [[w_ref[ky * KSIZE + kx] for kx in range(KSIZE)]
                 for ky in range(KSIZE)]
        w_max = [[w_ref[KSIZE * KSIZE + ky * KSIZE + kx] for kx in range(KSIZE)]
                 for ky in range(KSIZE)]

        # ---- hoisted lane (kx) shifts: 7 column-shifted planes per channel ----
        # (column masks shared between channels; rolls live on the XLU slot)
        avg_sh = [shifted(avg, kx - PAD, col_masks[kx - PAD]) for kx in range(KSIZE)]
        mx_sh = [shifted(mx, kx - PAD, col_masks[kx - PAD]) for kx in range(KSIZE)]

        # 7x7 conv (2 in-ch -> 1 out-ch, zero pad 3, no bias): accumulate over kx in
        # the un-row-shifted frame, then ONE row shift per ky (7 + 7 + 7 rolls total).
        acc = jnp.zeros((bt, HW), jnp.float32)
        for ky in range(KSIZE):
            dy = ky - PAD
            partial = jnp.zeros((bt, HW), jnp.float32)
            for kx in range(KSIZE):
                partial = partial + w_avg[ky][kx] * avg_sh[kx] + w_max[ky][kx] * mx_sh[kx]
            acc = acc + shifted(partial, dy * W, row_masks[dy])

        # y * sigmoid(y): exp and reciprocal both run on the EUP slot.
        out = acc * pl.reciprocal(1.0 + jnp.exp(-acc), approx=True)
        o_ref[...] = out.astype(o_ref.dtype)


def _vmem_capacity_bytes():
    # Per-generation VMEM capacity (v5e/v6e 128 MiB, v7x 64 MiB per TensorCore).
    try:
        info = pltpu.get_tpu_info()
        cap = getattr(info, "vmem_capacity_bytes", None)
        if cap:
            return int(cap)
    except Exception:
        pass
    return 64 * 1024 * 1024  # conservative fallback (v7x per-TC VMEM)


def _pick_batch_tile(B, HW):
    # ~19 live (bt, HW) f32 planes (14 hoisted shifted planes + acc/partial/avg/mx/
    # masks) must fit ~48 of the 64 4-KiB vregs so the unrolled tap loop never spills.
    reg_budget = 48 * 4096
    bt = max(1, min(8, reg_budget // (19 * 4 * HW)))
    # Keep >= 2 batch grid steps when B >= 2 so the "parallel" axis can shard across
    # both v7x TensorCores (harmless on v5e/v6e, which have a single TC).
    if B >= 2:
        bt = min(bt, -(-B // 2))
    return max(1, min(bt, B))


def _pick_channel_tile(C, bt, HW, itemsize, vmem_budget):
    # ct must equal C or be a multiple of 8 (BlockSpec tiling rule on the
    # second-minor block dim).  Budget: double-buffered input block + the f32
    # reduce intermediate per channel, plus the fixed f32 conv intermediates.
    per_c = bt * HW * (2 * itemsize + 4)
    fixed = 28 * bt * HW * 4
    cap = max(1, (vmem_budget - fixed) // max(per_c, 1))
    if cap >= C:
        return C
    ct = (cap // 8) * 8
    while ct >= 8 and C % ct:
        ct -= 8
    if ct >= 8:
        return ct
    # TODO(synk): pad C in the wrapper when no clean multiple-of-8 tile divides it.
    return C


def spatial_attention(x, conv_weight):
    """x: (B, C, H, W), conv_weight: (1, 2, 7, 7) -> (B, 1, H, W)."""
    B, C, H, W = x.shape
    HW = H * W
    x_flat = x.reshape(B, C, HW)                           # free metadata reshape
    w_flat = conv_weight.reshape(-1).astype(jnp.float32)   # (c, ky, kx) order

    itemsize = x.dtype.itemsize
    bt = _pick_batch_tile(B, HW)
    ct = _pick_channel_tile(C, bt, HW, itemsize, _vmem_capacity_bytes() // 4)

    # Real VMEM footprint: double-buffered in/out blocks + scratch accumulators
    # + f32 intermediates, with slack for compiler scratch.
    in_block = bt * ct * HW * itemsize
    out_block = bt * HW * itemsize
    est = (2 * in_block + 2 * out_block
           + 2 * bt * HW * 4            # sum/max scratch accumulators
           + bt * ct * HW * 4           # f32 reduce intermediate
           + 24 * bt * HW * 4)          # shifted planes / acc / masks
    vmem_limit = int(min(48 << 20, max(32 << 20, 2 * est)))

    grid = (pl.cdiv(B, bt), C // ct)    # ragged batch tail OK; ct divides C

    out_flat = pl.pallas_call(
        functools.partial(spatial_attention_kernel, W=W, C=C),
        out_shape=jax.ShapeDtypeStruct((B, 1, HW), x.dtype),
        grid_spec=pltpu.PrefetchScalarGridSpec(
            num_scalar_prefetch=0,
            grid=grid,
            in_specs=[
                pl.BlockSpec(memory_space=pltpu.MemorySpace.SMEM),     # weights
                pl.BlockSpec((bt, ct, HW), lambda b, c: (b, c, 0)),    # x tile
            ],
            out_specs=pl.BlockSpec((bt, None, HW), lambda b, c: (b, 0, 0)),
            scratch_shapes=[pltpu.VMEM((bt, HW), jnp.float32),         # channel sum
                            pltpu.VMEM((bt, HW), jnp.float32)],        # channel max
        ),
        compiler_params=pltpu.CompilerParams(
            dimension_semantics=("parallel", "arbitrary"),
            vmem_limit_bytes=vmem_limit),
    )(w_flat, x_flat)

    return out_flat.reshape(B, 1, H, W)


if __name__ == "__main__":
    key = jax.random.PRNGKey(0)
    key_x, key_w = jax.random.split(key)

    B, C, H, W = 2, 4, 16, 16
    x = jax.random.normal(key_x, (B, C, H, W), dtype=jnp.float32)

    # nn.Conv2d(2, 1, 7, padding=3, bias=False) -> weight shape (1, 2, 7, 7).
    fan_in = 2 * KSIZE * KSIZE
    bound = 1.0 / (fan_in ** 0.5)
    conv_w = jax.random.uniform(key_w, (1, 2, KSIZE, KSIZE), jnp.float32,
                                minval=-bound, maxval=bound)

    out = jax.block_until_ready(spatial_attention(x, conv_w))

    # Pure-JAX reference (matches the PyTorch forward: conv_out * sigmoid(conv_out)).
    avg_r = jnp.mean(x, axis=1, keepdims=True)
    max_r = jnp.max(x, axis=1, keepdims=True)
    feat = jnp.concatenate([avg_r, max_r], axis=1)
    ref = jax.lax.conv_general_dilated(
        feat, conv_w, window_strides=(1, 1),
        padding=[(PAD, PAD), (PAD, PAD)],
        dimension_numbers=("NCHW", "OIHW", "NCHW"))
    ref = ref * jax.nn.sigmoid(ref)

    assert out.shape == (B, 1, H, W)
    # 2e-3 tolerance leaves headroom for the approximate EUP reciprocal in the
    # sigmoid while still catching any real shift/indexing bug (those are O(0.1-1)).
    err = float(jnp.max(jnp.abs(out - ref)))
    assert jnp.allclose(out, ref, atol=2e-3, rtol=2e-3), err
    print("KERNEL_OK")
</pallas_src>

<mosaic_0001>
module attributes {stable_mosaic.version = 11 : i64} {
  func.func @spatial_attention_kernel(%arg0: i32, %arg1: i32, %arg2: memref<98xf32, #tpu.memory_space<smem>>, %arg3: memref<1x4x256xf32, #tpu.memory_space<vmem>>, %arg4: memref<1x1x256xf32, #tpu.memory_space<vmem>>, %arg5: memref<1x256xf32, #tpu.memory_space<vmem>>, %arg6: memref<1x256xf32, #tpu.memory_space<vmem>>) attributes {dimension_semantics = [#tpu.dimension_semantics<parallel>, #tpu.dimension_semantics<arbitrary>], iteration_bounds = array<i64: 2, 1>, scalar_prefetch = 0 : i64, scratch_operands = 2 : i64, tpu.core_type = #tpu.core_type<tc>, window_params = [{transform_indices = @transform_0, window_bounds = array<i64: 98>}, {transform_indices = @transform_1, window_bounds = array<i64: 1, 4, 256>}, {transform_indices = @transform_2, window_bounds = array<i64: 1, 1, 256>}]} {
    %c0_i32 = arith.constant 0 : i32
    %0 = arith.cmpi eq, %arg1, %c0_i32 : i32
    %1 = arith.extui %0 : i1 to i32
    %c0_i32_0 = arith.constant 0 : i32
    %2 = arith.cmpi ne, %1, %c0_i32_0 : i32
    scf.if %2 {
      %cst_14 = arith.constant 0.000000e+00 : f32
      %15 = vector.broadcast %cst_14 : f32 to vector<1x256xf32>
      %c0_15 = arith.constant 0 : index
      %c0_16 = arith.constant 0 : index
      %16 = vector.load %arg5[%c0_15, %c0_16] : memref<1x256xf32, #tpu.memory_space<vmem>>, vector<1x256xf32>
      tpu.vector_store %arg5[%c0_15, %c0_16], %15 {strides = array<i32>} : memref<1x256xf32, #tpu.memory_space<vmem>>, vector<1x256xf32>,
      %cst_17 = arith.constant 0xFF800000 : f32
      %17 = vector.broadcast %cst_17 : f32 to vector<1x256xf32>
      %c0_18 = arith.constant 0 : index
      %c0_19 = arith.constant 0 : index
      %18 = vector.load %arg6[%c0_18, %c0_19] : memref<1x256xf32, #tpu.memory_space<vmem>>, vector<1x256xf32>
      tpu.vector_store %arg6[%c0_18, %c0_19], %17 {strides = array<i32>} : memref<1x256xf32, #tpu.memory_space<vmem>>, vector<1x256xf32>,
    } else {
    }
    %c0 = arith.constant 0 : index
    %c0_1 = arith.constant 0 : index
    %c0_2 = arith.constant 0 : index
    %3 = vector.load %arg3[%c0, %c0_1, %c0_2] : memref<1x4x256xf32, #tpu.memory_space<vmem>>, vector<1x4x256xf32>
    %c0_3 = arith.constant 0 : index
    %c0_4 = arith.constant 0 : index
    %4 = vector.load %arg5[%c0_3, %c0_4] : memref<1x256xf32, #tpu.memory_space<vmem>>, vector<1x256xf32>
    %cst = arith.constant dense<0.000000e+00> : vector<1x256xf32>
    %5 = vector.multi_reduction <add>, %3, %cst [1] : vector<1x4x256xf32> to vector<1x256xf32>
    %6 = arith.addf %4, %5 : vector<1x256xf32>
    %c0_5 = arith.constant 0 : index
    %c0_6 = arith.constant 0 : index
    %7 = vector.load %arg5[%c0_5, %c0_6] : memref<1x256xf32, #tpu.memory_space<vmem>>, vector<1x256xf32>
    tpu.vector_store %arg5[%c0_5, %c0_6], %6 {strides = array<i32>} : memref<1x256xf32, #tpu.memory_space<vmem>>, vector<1x256xf32>,
    %c0_7 = arith.constant 0 : index
    %c0_8 = arith.constant 0 : index
    %8 = vector.load %arg6[%c0_7, %c0_8] : memref<1x256xf32, #tpu.memory_space<vmem>>, vector<1x256xf32>
    %cst_9 = arith.constant dense<0xFF800000> : vector<1x256xf32>
    %9 = vector.multi_reduction <maximumf>, %3, %cst_9 [1] : vector<1x4x256xf32> to vector<1x256xf32>
    %10 = arith.maximumf %8, %9 : vector<1x256xf32>
    %c0_10 = arith.constant 0 : index
    %c0_11 = arith.constant 0 : index
    %11 = vector.load %arg6[%c0_10, %c0_11] : memref<1x256xf32, #tpu.memory_space<vmem>>, vector<1x256xf32>
    tpu.vector_store %arg6[%c0_10, %c0_11], %10 {strides = array<i32>} : memref<1x256xf32, #tpu.memory_space<vmem>>, vector<1x256xf32>,
    %c0_i32_12 = arith.constant 0 : i32
    %12 = arith.cmpi eq, %arg1, %c0_i32_12 : i32
    %13 = arith.extui %12 : i1 to i32
    %c0_i32_13 = arith.constant 0 : i32
    %14 = arith.cmpi ne, %13, %c0_i32_13 : i32
    scf.if %14 {
      %c0_14 = arith.constant 0 : index
      %c0_15 = arith.constant 0 : index
      %15 = vector.load %arg5[%c0_14, %c0_15] : memref<1x256xf32, #tpu.memory_space<vmem>>, vector<1x256xf32>
      %cst_16 = arith.constant 2.500000e-01 : f32
      %16 = vector.broadcast %cst_16 : f32 to vector<1x256xf32>
      %17 = arith.mulf %15, %16 : vector<1x256xf32>
      %c0_17 = arith.constant 0 : index
      %c0_18 = arith.constant 0 : index
      %18 = vector.load %arg6[%c0_17, %c0_18] : memref<1x256xf32, #tpu.memory_space<vmem>>, vector<1x256xf32>
      %19 = tpu.iota {dimensions = array<i32: 1>} : vector<1x256xi32>
      %c15_i32 = arith.constant 15 : i32
      %20 = vector.broadcast %c15_i32 : i32 to vector<1x256xi32>
      %21 = arith.andi %19, %20 : vector<1x256xi32>
      %c3_i32 = arith.constant 3 : i32
      %22 = vector.broadcast %c3_i32 : i32 to vector<1x256xi32>
      %23 = arith.cmpi sge, %21, %22 : vector<1x256xi32>
      %c2_i32 = arith.constant 2 : i32
      %24 = vector.broadcast %c2_i32 : i32 to vector<1x256xi32>
      %25 = arith.cmpi sge, %21, %24 : vector<1x256xi32>
      %c1_i32 = arith.constant 1 : i32
      %26 = vector.broadcast %c1_i32 : i32 to vector<1x256xi32>
      %27 = arith.cmpi sge, %21, %26 : vector<1x256xi32>
      %c15_i32_19 = arith.constant 15 : i32
      %28 = vector.broadcast %c15_i32_19 : i32 to vector<1x256xi32>
      %29 = arith.cmpi slt, %21, %28 : vector<1x256xi32>
      %c14_i32 = arith.constant 14 : i32
      %30 = vector.broadcast %c14_i32 : i32 to vector<1x256xi32>
      %31 = arith.cmpi slt, %21, %30 : vector<1x256xi32>
      %c13_i32 = arith.constant 13 : i32
      %32 = vector.broadcast %c13_i32 : i32 to vector<1x256xi32>
      %33 = arith.cmpi slt, %21, %32 : vector<1x256xi32>
      %c48_i32 = arith.constant 48 : i32
      %34 = vector.broadcast %c48_i32 : i32 to vector<1x256xi32>
      %35 = arith.cmpi sge, %19, %34 : vector<1x256xi32>
      %c32_i32 = arith.constant 32 : i32
      %36 = vector.broadcast %c32_i32 : i32 to vector<1x256xi32>
      %37 = arith.cmpi sge, %19, %36 : vector<1x256xi32>
      %c16_i32 = arith.constant 16 : i32
      %38 = vector.broadcast %c16_i32 : i32 to vector<1x256xi32>
      %39 = arith.cmpi sge, %19, %38 : vector<1x256xi32>
      %c240_i32 = arith.constant 240 : i32
      %40 = vector.broadcast %c240_i32 : i32 to vector<1x256xi32>
      %41 = arith.cmpi slt, %19, %40 : vector<1x256xi32>
      %c224_i32 = arith.constant 224 : i32
      %42 = vector.broadcast %c224_i32 : i32 to vector<1x256xi32>
      %43 = arith.cmpi slt, %19, %42 : vector<1x256xi32>
      %c208_i32 = arith.constant 208 : i32
      %44 = vector.broadcast %c208_i32 : i32 to vector<1x256xi32>
      %45 = arith.cmpi slt, %19, %44 : vector<1x256xi32>
      %c0_20 = arith.constant 0 : index
      %46 = memref.load %arg2[%c0_20] : memref<98xf32, #tpu.memory_space<smem>>
      %c1 = arith.constant 1 : index
      %47 = memref.load %arg2[%c1] : memref<98xf32, #tpu.memory_space<smem>>
      %c2 = arith.constant 2 : index
      %48 = memref.load %arg2[%c2] : memref<98xf32, #tpu.memory_space<smem>>
      %c3 = arith.constant 3 : index
      %49 = memref.load %arg2[%c3] : memref<98xf32, #tpu.memory_space<smem>>
      %c4 = arith.constant 4 : index
      %50 = memref.load %arg2[%c4] : memref<98xf32, #tpu.memory_space<smem>>
      %c5 = arith.constant 5 : index
      %51 = memref.load %arg2[%c5] : memref<98xf32, #tpu.memory_space<smem>>
      %c6 = arith.constant 6 : index
      %52 = memref.load %arg2[%c6] : memref<98xf32, #tpu.memory_space<smem>>
      %c7 = arith.constant 7 : index
      %53 = memref.load %arg2[%c7] : memref<98xf32, #tpu.memory_space<smem>>
      %c8 = arith.constant 8 : index
      %54 = memref.load %arg2[%c8] : memref<98xf32, #tpu.memory_space<smem>>
      %c9 = arith.constant 9 : index
      %55 = memref.load %arg2[%c9] : memref<98xf32, #tpu.memory_space<smem>>
      %c10 = arith.constant 10 : index
      %56 = memref.load %arg2[%c10] : memref<98xf32, #tpu.memory_space<smem>>
      %c11 = arith.constant 11 : index
      %57 = memref.load %arg2[%c11] : memref<98xf32, #tpu.memory_space<smem>>
      %c12 = arith.constant 12 : index
      %58 = memref.load %arg2[%c12] : memref<98xf32, #tpu.memory_space<smem>>
      %c13 = arith.constant 13 : index
      %59 = memref.load %arg2[%c13] : memref<98xf32, #tpu.memory_space<smem>>
      %c14 = arith.constant 14 : index
      %60 = memref.load %arg2[%c14] : memref<98xf32, #tpu.memory_space<smem>>
      %c15 = arith.constant 15 : index
      %61 = memref.load %arg2[%c15] : memref<98xf32, #tpu.memory_space<smem>>
      %c16 = arith.constant 16 : index
      %62 = memref.load %arg2[%c16] : memref<98xf32, #tpu.memory_space<smem>>
      %c17 = arith.constant 17 : index
      %63 = memref.load %arg2[%c17] : memref<98xf32, #tpu.memory_space<smem>>
      %c18 = arith.constant 18 : index
      %64 = memref.load %arg2[%c18] : memref<98xf32, #tpu.memory_space<smem>>
      %c19 = arith.constant 19 : index
      %65 = memref.load %arg2[%c19] : memref<98xf32, #tpu.memory_space<smem>>
      %c20 = arith.constant 20 : index
      %66 = memref.load %arg2[%c20] : memref<98xf32, #tpu.memory_space<smem>>
      %c21 = arith.constant 21 : index
      %67 = memref.load %arg2[%c21] : memref<98xf32, #tpu.memory_space<smem>>
      %c22 = arith.constant 22 : index
      %68 = memref.load %arg2[%c22] : memref<98xf32, #tpu.memory_space<smem>>
      %c23 = arith.constant 23 : index
      %69 = memref.load %arg2[%c23] : memref<98xf32, #tpu.memory_space<smem>>
      %c24 = arith.constant 24 : index
      %70 = memref.load %arg2[%c24] : memref<98xf32, #tpu.memory_space<smem>>
      %c25 = arith.constant 25 : index
      %71 = memref.load %arg2[%c25] : memref<98xf32, #tpu.memory_space<smem>>
      %c26 = arith.constant 26 : index
      %72 = memref.load %arg2[%c26] : memref<98xf32, #tpu.memory_space<smem>>
      %c27 = arith.constant 27 : index
      %73 = memref.load %arg2[%c27] : memref<98xf32, #tpu.memory_space<smem>>
      %c28 = arith.constant 28 : index
      %74 = memref.load %arg2[%c28] : memref<98xf32, #tpu.memory_space<smem>>
      %c29 = arith.constant 29 : index
      %75 = memref.load %arg2[%c29] : memref<98xf32, #tpu.memory_space<smem>>
      %c30 = arith.constant 30 : index
      %76 = memref.load %arg2[%c30] : memref<98xf32, #tpu.memory_space<smem>>
      %c31 = arith.constant 31 : index
      %77 = memref.load %arg2[%c31] : memref<98xf32, #tpu.memory_space<smem>>
      %c32 = arith.constant 32 : index
      %78 = memref.load %arg2[%c32] : memref<98xf32, #tpu.memory_space<smem>>
      %c33 = arith.constant 33 : index
      %79 = memref.load %arg2[%c33] : memref<98xf32, #tpu.memory_space<smem>>
      %c34 = arith.constant 34 : index
      %80 = memref.load %arg2[%c34] : memref<98xf32, #tpu.memory_space<smem>>
      %c35 = arith.constant 35 : index
      %81 = memref.load %arg2[%c35] : memref<98xf32, #tpu.memory_space<smem>>
      %c36 = arith.constant 36 : index
      %82 = memref.load %arg2[%c36] : memref<98xf32, #tpu.memory_space<smem>>
      %c37 = arith.constant 37 : index
      %83 = memref.load %arg2[%c37] : memref<98xf32, #tpu.memory_space<smem>>
      %c38 = arith.constant 38 : index
      %84 = memref.load %arg2[%c38] : memref<98xf32, #tpu.memory_space<smem>>
      %c39 = arith.constant 39 : index
      %85 = memref.load %arg2[%c39] : memref<98xf32, #tpu.memory_space<smem>>
      %c40 = arith.constant 40 : index
      %86 = memref.load %arg2[%c40] : memref<98xf32, #tpu.memory_space<smem>>
      %c41 = arith.constant 41 : index
      %87 = memref.load %arg2[%c41] : memref<98xf32, #tpu.memory_space<smem>>
      %c42 = arith.constant 42 : index
      %88 = memref.load %arg2[%c42] : memref<98xf32, #tpu.memory_space<smem>>
      %c43 = arith.constant 43 : index
      %89 = memref.load %arg2[%c43] : memref<98xf32, #tpu.memory_space<smem>>
      %c44 = arith.constant 44 : index
      %90 = memref.load %arg2[%c44] : memref<98xf32, #tpu.memory_space<smem>>
      %c45 = arith.constant 45 : index
      %91 = memref.load %arg2[%c45] : memref<98xf32, #tpu.memory_space<smem>>
      %c46 = arith.constant 46 : index
      %92 = memref.load %arg2[%c46] : memref<98xf32, #tpu.memory_space<smem>>
      %c47 = arith.constant 47 : index
      %93 = memref.load %arg2[%c47] : memref<98xf32, #tpu.memory_space<smem>>
      %c48 = arith.constant 48 : index
      %94 = memref.load %arg2[%c48] : memref<98xf32, #tpu.memory_space<smem>>
      %c49 = arith.constant 49 : index
      %95 = memref.load %arg2[%c49] : memref<98xf32, #tpu.memory_space<smem>>
      %c50 = arith.constant 50 : index
      %96 = memref.load %arg2[%c50] : memref<98xf32, #tpu.memory_space<smem>>
      %c51 = arith.constant 51 : index
      %97 = memref.load %arg2[%c51] : memref<98xf32, #tpu.memory_space<smem>>
      %c52 = arith.constant 52 : index
      %98 = memref.load %arg2[%c52] : memref<98xf32, #tpu.memory_space<smem>>
      %c53 = arith.constant 53 : index
      %99 = memref.load %arg2[%c53] : memref<98xf32, #tpu.memory_space<smem>>
      %c54 = arith.constant 54 : index
      %100 = memref.load %arg2[%c54] : memref<98xf32, #tpu.memory_space<smem>>
      %c55 = arith.constant 55 : index
      %101 = memref.load %arg2[%c55] : memref<98xf32, #tpu.memory_space<smem>>
      %c56 = arith.constant 56 : index
      %102 = memref.load %arg2[%c56] : memref<98xf32, #tpu.memory_space<smem>>
      %c57 = arith.constant 57 : index
      %103 = memref.load %arg2[%c57] : memref<98xf32, #tpu.memory_space<smem>>
      %c58 = arith.constant 58 : index
      %104 = memref.load %arg2[%c58] : memref<98xf32, #tpu.memory_space<smem>>
      %c59 = arith.constant 59 : index
      %105 = memref.load %arg2[%c59] : memref<98xf32, #tpu.memory_space<smem>>
      %c60 = arith.constant 60 : index
      %106 = memref.load %arg2[%c60] : memref<98xf32, #tpu.memory_space<smem>>
      %c61 = arith.constant 61 : index
      %107 = memref.load %arg2[%c61] : memref<98xf32, #tpu.memory_space<smem>>
      %c62 = arith.constant 62 : index
      %108 = memref.load %arg2[%c62] : memref<98xf32, #tpu.memory_space<smem>>
      %c63 = arith.constant 63 : index
      %109 = memref.load %arg2[%c63] : memref<98xf32, #tpu.memory_space<smem>>
      %c64 = arith.constant 64 : index
      %110 = memref.load %arg2[%c64] : memref<98xf32, #tpu.memory_space<smem>>
      %c65 = arith.constant 65 : index
      %111 = memref.load %arg2[%c65] : memref<98xf32, #tpu.memory_space<smem>>
      %c66 = arith.constant 66 : index
      %112 = memref.load %arg2[%c66] : memref<98xf32, #tpu.memory_space<smem>>
      %c67 = arith.constant 67 : index
      %113 = memref.load %arg2[%c67] : memref<98xf32, #tpu.memory_space<smem>>
      %c68 = arith.constant 68 : index
      %114 = memref.load %arg2[%c68] : memref<98xf32, #tpu.memory_space<smem>>
      %c69 = arith.constant 69 : index
      %115 = memref.load %arg2[%c69] : memref<98xf32, #tpu.memory_space<smem>>
      %c70 = arith.constant 70 : index
      %116 = memref.load %arg2[%c70] : memref<98xf32, #tpu.memory_space<smem>>
      %c71 = arith.constant 71 : index
      %117 = memref.load %arg2[%c71] : memref<98xf32, #tpu.memory_space<smem>>
      %c72 = arith.constant 72 : index
      %118 = memref.load %arg2[%c72] : memref<98xf32, #tpu.memory_space<smem>>
      %c73 = arith.constant 73 : index
      %119 = memref.load %arg2[%c73] : memref<98xf32, #tpu.memory_space<smem>>
      %c74 = arith.constant 74 : index
      %120 = memref.load %arg2[%c74] : memref<98xf32, #tpu.memory_space<smem>>
      %c75 = arith.constant 75 : index
      %121 = memref.load %arg2[%c75] : memref<98xf32, #tpu.memory_space<smem>>
      %c76 = arith.constant 76 : index
      %122 = memref.load %arg2[%c76] : memref<98xf32, #tpu.memory_space<smem>>
      %c77 = arith.constant 77 : index
      %123 = memref.load %arg2[%c77] : memref<98xf32, #tpu.memory_space<smem>>
      %c78 = arith.constant 78 : index
      %124 = memref.load %arg2[%c78] : memref<98xf32, #tpu.memory_space<smem>>
      %c79 = arith.constant 79 : index
      %125 = memref.load %arg2[%c79] : memref<98xf32, #tpu.memory_space<smem>>
      %c80 = arith.constant 80 : index
      %126 = memref.load %arg2[%c80] : memref<98xf32, #tpu.memory_space<smem>>
      %c81 = arith.constant 81 : index
      %127 = memref.load %arg2[%c81] : memref<98xf32, #tpu.memory_space<smem>>
      %c82 = arith.constant 82 : index
      %128 = memref.load %arg2[%c82] : memref<98xf32, #tpu.memory_space<smem>>
      %c83 = arith.constant 83 : index
      %129 = memref.load %arg2[%c83] : memref<98xf32, #tpu.memory_space<smem>>
      %c84 = arith.constant 84 : index
      %130 = memref.load %arg2[%c84] : memref<98xf32, #tpu.memory_space<smem>>
      %c85 = arith.constant 85 : index
      %131 = memref.load %arg2[%c85] : memref<98xf32, #tpu.memory_space<smem>>
      %c86 = arith.constant 86 : index
      %132 = memref.load %arg2[%c86] : memref<98xf32, #tpu.memory_space<smem>>
      %c87 = arith.constant 87 : index
      %133 = memref.load %arg2[%c87] : memref<98xf32, #tpu.memory_space<smem>>
      %c88 = arith.constant 88 : index
      %134 = memref.load %arg2[%c88] : memref<98xf32, #tpu.memory_space<smem>>
      %c89 = arith.constant 89 : index
      %135 = memref.load %arg2[%c89] : memref<98xf32, #tpu.memory_space<smem>>
      %c90 = arith.constant 90 : index
      %136 = memref.load %arg2[%c90] : memref<98xf32, #tpu.memory_space<smem>>
      %c91 = arith.constant 91 : index
      %137 = memref.load %arg2[%c91] : memref<98xf32, #tpu.memory_space<smem>>
      %c92 = arith.constant 92 : index
      %138 = memref.load %arg2[%c92] : memref<98xf32, #tpu.memory_space<smem>>
      %c93 = arith.constant 93 : index
      %139 = memref.load %arg2[%c93] : memref<98xf32, #tpu.memory_space<smem>>
      %c94 = arith.constant 94 : index
      %140 = memref.load %arg2[%c94] : memref<98xf32, #tpu.memory_space<smem>>
      %c95 = arith.constant 95 : index
      %141 = memref.load %arg2[%c95] : memref<98xf32, #tpu.memory_space<smem>>
      %c96 = arith.constant 96 : index
      %142 = memref.load %arg2[%c96] : memref<98xf32, #tpu.memory_space<smem>>
      %c97 = arith.constant 97 : index
      %143 = memref.load %arg2[%c97] : memref<98xf32, #tpu.memory_space<smem>>
      %c3_i32_21 = arith.constant 3 : i32
      %144 = tpu.dynamic_rotate %17 by %c3_i32_21 dim 1 : vector<1x256xf32>, i32 -> vector<1x256xf32>
      %cst_22 = arith.constant 0.000000e+00 : f32
      %145 = vector.broadcast %cst_22 : f32 to vector<1x256xf32>
      %146 = arith.select %23, %144, %145 : vector<1x256xi1>, vector<1x256xf32>
      %c2_i32_23 = arith.constant 2 : i32
      %147 = tpu.dynamic_rotate %17 by %c2_i32_23 dim 1 : vector<1x256xf32>, i32 -> vector<1x256xf32>
      %cst_24 = arith.constant 0.000000e+00 : f32
      %148 = vector.broadcast %cst_24 : f32 to vector<1x256xf32>
      %149 = arith.select %25, %147, %148 : vector<1x256xi1>, vector<1x256xf32>
      %c1_i32_25 = arith.constant 1 : i32
      %150 = tpu.dynamic_rotate %17 by %c1_i32_25 dim 1 : vector<1x256xf32>, i32 -> vector<1x256xf32>
      %cst_26 = arith.constant 0.000000e+00 : f32
      %151 = vector.broadcast %cst_26 : f32 to vector<1x256xf32>
      %152 = arith.select %27, %150, %151 : vector<1x256xi1>, vector<1x256xf32>
      %c255_i32 = arith.constant 255 : i32
      %153 = tpu.dynamic_rotate %17 by %c255_i32 dim 1 : vector<1x256xf32>, i32 -> vector<1x256xf32>
      %cst_27 = arith.constant 0.000000e+00 : f32
      %154 = vector.broadcast %cst_27 : f32 to vector<1x256xf32>
      %155 = arith.select %29, %153, %154 : vector<1x256xi1>, vector<1x256xf32>
      %c254_i32 = arith.constant 254 : i32
      %156 = tpu.dynamic_rotate %17 by %c254_i32 dim 1 : vector<1x256xf32>, i32 -> vector<1x256xf32>
      %cst_28 = arith.constant 0.000000e+00 : f32
      %157 = vector.broadcast %cst_28 : f32 to vector<1x256xf32>
      %158 = arith.select %31, %156, %157 : vector<1x256xi1>, vector<1x256xf32>
      %c253_i32 = arith.constant 253 : i32
      %159 = tpu.dynamic_rotate %17 by %c253_i32 dim 1 : vector<1x256xf32>, i32 -> vector<1x256xf32>
      %cst_29 = arith.constant 0.000000e+00 : f32
      %160 = vector.broadcast %cst_29 : f32 to vector<1x256xf32>
      %161 = arith.select %33, %159, %160 : vector<1x256xi1>, vector<1x256xf32>
      %c3_i32_30 = arith.constant 3 : i32
      %162 = tpu.dynamic_rotate %18 by %c3_i32_30 dim 1 : vector<1x256xf32>, i32 -> vector<1x256xf32>
      %cst_31 = arith.constant 0.000000e+00 : f32
      %163 = vector.broadcast %cst_31 : f32 to vector<1x256xf32>
      %164 = arith.select %23, %162, %163 : vector<1x256xi1>, vector<1x256xf32>
      %c2_i32_32 = arith.constant 2 : i32
      %165 = tpu.dynamic_rotate %18 by %c2_i32_32 dim 1 : vector<1x256xf32>, i32 -> vector<1x256xf32>
      %cst_33 = arith.constant 0.000000e+00 : f32
      %166 = vector.broadcast %cst_33 : f32 to vector<1x256xf32>
      %167 = arith.select %25, %165, %166 : vector<1x256xi1>, vector<1x256xf32>
      %c1_i32_34 = arith.constant 1 : i32
      %168 = tpu.dynamic_rotate %18 by %c1_i32_34 dim 1 : vector<1x256xf32>, i32 -> vector<1x256xf32>
      %cst_35 = arith.constant 0.000000e+00 : f32
      %169 = vector.broadcast %cst_35 : f32 to vector<1x256xf32>
      %170 = arith.select %27, %168, %169 : vector<1x256xi1>, vector<1x256xf32>
      %c255_i32_36 = arith.constant 255 : i32
      %171 = tpu.dynamic_rotate %18 by %c255_i32_36 dim 1 : vector<1x256xf32>, i32 -> vector<1x256xf32>
      %cst_37 = arith.constant 0.000000e+00 : f32
      %172 = vector.broadcast %cst_37 : f32 to vector<1x256xf32>
      %173 = arith.select %29, %171, %172 : vector<1x256xi1>, vector<1x256xf32>
      %c254_i32_38 = arith.constant 254 : i32
      %174 = tpu.dynamic_rotate %18 by %c254_i32_38 dim 1 : vector<1x256xf32>, i32 -> vector<1x256xf32>
      %cst_39 = arith.constant 0.000000e+00 : f32
      %175 = vector.broadcast %cst_39 : f32 to vector<1x256xf32>
      %176 = arith.select %31, %174, %175 : vector<1x256xi1>, vector<1x256xf32>
      %c253_i32_40 = arith.constant 253 : i32
      %177 = tpu.dynamic_rotate %18 by %c253_i32_40 dim 1 : vector<1x256xf32>, i32 -> vector<1x256xf32>
      %cst_41 = arith.constant 0.000000e+00 : f32
      %178 = vector.broadcast %cst_41 : f32 to vector<1x256xf32>
      %179 = arith.select %33, %177, %178 : vector<1x256xi1>, vector<1x256xf32>
      %cst_42 = arith.constant 0.000000e+00 : f32
      %180 = vector.broadcast %cst_42 : f32 to vector<1x256xf32>
      %cst_43 = arith.constant 0.000000e+00 : f32
      %181 = vector.broadcast %cst_43 : f32 to vector<1x256xf32>
      %182 = vector.broadcast %46 : f32 to vector<1x256xf32>
      %183 = arith.mulf %182, %146 : vector<1x256xf32>
      %184 = arith.addf %181, %183 : vector<1x256xf32>
      %185 = vector.broadcast %95 : f32 to vector<1x256xf32>
      %186 = arith.mulf %185, %164 : vector<1x256xf32>
      %187 = arith.addf %184, %186 : vector<1x256xf32>
      %188 = vector.broadcast %47 : f32 to vector<1x256xf32>
      %189 = arith.mulf %188, %149 : vector<1x256xf32>
      %190 = arith.addf %187, %189 : vector<1x256xf32>
      %191 = vector.broadcast %96 : f32 to vector<1x256xf32>
      %192 = arith.mulf %191, %167 : vector<1x256xf32>
      %193 = arith.addf %190, %192 : vector<1x256xf32>
      %194 = vector.broadcast %48 : f32 to vector<1x256xf32>
      %195 = arith.mulf %194, %152 : vector<1x256xf32>
      %196 = arith.addf %193, %195 : vector<1x256xf32>
      %197 = vector.broadcast %97 : f32 to vector<1x256xf32>
      %198 = arith.mulf %197, %170 : vector<1x256xf32>
      %199 = arith.addf %196, %198 : vector<1x256xf32>
      %200 = vector.broadcast %49 : f32 to vector<1x256xf32>
      %201 = arith.mulf %200, %17 : vector<1x256xf32>
      %202 = arith.addf %199, %201 : vector<1x256xf32>
      %203 = vector.broadcast %98 : f32 to vector<1x256xf32>
      %204 = arith.mulf %203, %18 : vector<1x256xf32>
      %205 = arith.addf %202, %204 : vector<1x256xf32>
      %206 = vector.broadcast %50 : f32 to vector<1x256xf32>
      %207 = arith.mulf %206, %155 : vector<1x256xf32>
      %208 = arith.addf %205, %207 : vector<1x256xf32>
      %209 = vector.broadcast %99 : f32 to vector<1x256xf32>
      %210 = arith.mulf %209, %173 : vector<1x256xf32>
      %211 = arith.addf %208, %210 : vector<1x256xf32>
      %212 = vector.broadcast %51 : f32 to vector<1x256xf32>
      %213 = arith.mulf %212, %158 : vector<1x256xf32>
      %214 = arith.addf %211, %213 : vector<1x256xf32>
      %215 = vector.broadcast %100 : f32 to vector<1x256xf32>
      %216 = arith.mulf %215, %176 : vector<1x256xf32>
      %217 = arith.addf %214, %216 : vector<1x256xf32>
      %218 = vector.broadcast %52 : f32 to vector<1x256xf32>
      %219 = arith.mulf %218, %161 : vector<1x256xf32>
      %220 = arith.addf %217, %219 : vector<1x256xf32>
      %221 = vector.broadcast %101 : f32 to vector<1x256xf32>
      %222 = arith.mulf %221, %179 : vector<1x256xf32>
      %223 = arith.addf %220, %222 : vector<1x256xf32>
      %c48_i32_44 = arith.constant 48 : i32
      %224 = tpu.dynamic_rotate %223 by %c48_i32_44 dim 1 : vector<1x256xf32>, i32 -> vector<1x256xf32>
      %cst_45 = arith.constant 0.000000e+00 : f32
      %225 = vector.broadcast %cst_45 : f32 to vector<1x256xf32>
      %226 = arith.select %35, %224, %225 : vector<1x256xi1>, vector<1x256xf32>
      %227 = arith.addf %180, %226 : vector<1x256xf32>
      %cst_46 = arith.constant 0.000000e+00 : f32
      %228 = vector.broadcast %cst_46 : f32 to vector<1x256xf32>
      %229 = vector.broadcast %53 : f32 to vector<1x256xf32>
      %230 = arith.mulf %229, %146 : vector<1x256xf32>
      %231 = arith.addf %228, %230 : vector<1x256xf32>
      %232 = vector.broadcast %102 : f32 to vector<1x256xf32>
      %233 = arith.mulf %232, %164 : vector<1x256xf32>
      %234 = arith.addf %231, %233 : vector<1x256xf32>
      %235 = vector.broadcast %54 : f32 to vector<1x256xf32>
      %236 = arith.mulf %235, %149 : vector<1x256xf32>
      %237 = arith.addf %234, %236 : vector<1x256xf32>
      %238 = vector.broadcast %103 : f32 to vector<1x256xf32>
      %239 = arith.mulf %238, %167 : vector<1x256xf32>
      %240 = arith.addf %237, %239 : vector<1x256xf32>
      %241 = vector.broadcast %55 : f32 to vector<1x256xf32>
      %242 = arith.mulf %241, %152 : vector<1x256xf32>
      %243 = arith.addf %240, %242 : vector<1x256xf32>
      %244 = vector.broadcast %104 : f32 to vector<1x256xf32>
      %245 = arith.mulf %244, %170 : vector<1x256xf32>
      %246 = arith.addf %243, %245 : vector<1x256xf32>
      %247 = vector.broadcast %56 : f32 to vector<1x256xf32>
      %248 = arith.mulf %247, %17 : vector<1x256xf32>
      %249 = arith.addf %246, %248 : vector<1x256xf32>
      %250 = vector.broadcast %105 : f32 to vector<1x256xf32>
      %251 = arith.mulf %250, %18 : vector<1x256xf32>
      %252 = arith.addf %249, %251 : vector<1x256xf32>
      %253 = vector.broadcast %57 : f32 to vector<1x256xf32>
      %254 = arith.mulf %253, %155 : vector<1x256xf32>
      %255 = arith.addf %252, %254 : vector<1x256xf32>
      %256 = vector.broadcast %106 : f32 to vector<1x256xf32>
      %257 = arith.mulf %256, %173 : vector<1x256xf32>
      %258 = arith.addf %255, %257 : vector<1x256xf32>
      %259 = vector.broadcast %58 : f32 to vector<1x256xf32>
      %260 = arith.mulf %259, %158 : vector<1x256xf32>
      %261 = arith.addf %258, %260 : vector<1x256xf32>
      %262 = vector.broadcast %107 : f32 to vector<1x256xf32>
      %263 = arith.mulf %262, %176 : vector<1x256xf32>
      %264 = arith.addf %261, %263 : vector<1x256xf32>
      %265 = vector.broadcast %59 : f32 to vector<1x256xf32>
      %266 = arith.mulf %265, %161 : vector<1x256xf32>
      %267 = arith.addf %264, %266 : vector<1x256xf32>
      %268 = vector.broadcast %108 : f32 to vector<1x256xf32>
      %269 = arith.mulf %268, %179 : vector<1x256xf32>
      %270 = arith.addf %267, %269 : vector<1x256xf32>
      %c32_i32_47 = arith.constant 32 : i32
      %271 = tpu.dynamic_rotate %270 by %c32_i32_47 dim 1 : vector<1x256xf32>, i32 -> vector<1x256xf32>
      %cst_48 = arith.constant 0.000000e+00 : f32
      %272 = vector.broadcast %cst_48 : f32 to vector<1x256xf32>
      %273 = arith.select %37, %271, %272 : vector<1x256xi1>, vector<1x256xf32>
      %274 = arith.addf %227, %273 : vector<1x256xf32>
      %cst_49 = arith.constant 0.000000e+00 : f32
      %275 = vector.broadcast %cst_49 : f32 to vector<1x256xf32>
      %276 = vector.broadcast %60 : f32 to vector<1x256xf32>
      %277 = arith.mulf %276, %146 : vector<1x256xf32>
      %278 = arith.addf %275, %277 : vector<1x256xf32>
      %279 = vector.broadcast %109 : f32 to vector<1x256xf32>
      %280 = arith.mulf %279, %164 : vector<1x256xf32>
      %281 = arith.addf %278, %280 : vector<1x256xf32>
      %282 = vector.broadcast %61 : f32 to vector<1x256xf32>
      %283 = arith.mulf %282, %149 : vector<1x256xf32>
      %284 = arith.addf %281, %283 : vector<1x256xf32>
      %285 = vector.broadcast %110 : f32 to vector<1x256xf32>
      %286 = arith.mulf %285, %167 : vector<1x256xf32>
      %287 = arith.addf %284, %286 : vector<1x256xf32>
      %288 = vector.broadcast %62 : f32 to vector<1x256xf32>
      %289 = arith.mulf %288, %152 : vector<1x256xf32>
      %290 = arith.addf %287, %289 : vector<1x256xf32>
      %291 = vector.broadcast %111 : f32 to vector<1x256xf32>
      %292 = arith.mulf %291, %170 : vector<1x256xf32>
      %293 = arith.addf %290, %292 : vector<1x256xf32>
      %294 = vector.broadcast %63 : f32 to vector<1x256xf32>
      %295 = arith.mulf %294, %17 : vector<1x256xf32>
      %296 = arith.addf %293, %295 : vector<1x256xf32>
      %297 = vector.broadcast %112 : f32 to vector<1x256xf32>
      %298 = arith.mulf %297, %18 : vector<1x256xf32>
      %299 = arith.addf %296, %298 : vector<1x256xf32>
      %300 = vector.broadcast %64 : f32 to vector<1x256xf32>
      %301 = arith.mulf %300, %155 : vector<1x256xf32>
      %302 = arith.addf %299, %301 : vector<1x256xf32>
      %303 = vector.broadcast %113 : f32 to vector<1x256xf32>
      %304 = arith.mulf %303, %173 : vector<1x256xf32>
      %305 = arith.addf %302, %304 : vector<1x256xf32>
      %306 = vector.broadcast %65 : f32 to vector<1x256xf32>
      %307 = arith.mulf %306, %158 : vector<1x256xf32>
      %308 = arith.addf %305, %307 : vector<1x256xf32>
      %309 = vector.broadcast %114 : f32 to vector<1x256xf32>
      %310 = arith.mulf %309, %176 : vector<1x256xf32>
      %311 = arith.addf %308, %310 : vector<1x256xf32>
      %312 = vector.broadcast %66 : f32 to vector<1x256xf32>
      %313 = arith.mulf %312, %161 : vector<1x256xf32>
      %314 = arith.addf %311, %313 : vector<1x256xf32>
      %315 = vector.broadcast %115 : f32 to vector<1x256xf32>
      %316 = arith.mulf %315, %179 : vector<1x256xf32>
      %317 = arith.addf %314, %316 : vector<1x256xf32>
      %c16_i32_50 = arith.constant 16 : i32
      %318 = tpu.dynamic_rotate %317 by %c16_i32_50 dim 1 : vector<1x256xf32>, i32 -> vector<1x256xf32>
      %cst_51 = arith.constant 0.000000e+00 : f32
      %319 = vector.broadcast %cst_51 : f32 to vector<1x256xf32>
      %320 = arith.select %39, %318, %319 : vector<1x256xi1>, vector<1x256xf32>
      %321 = arith.addf %274, %320 : vector<1x256xf32>
      %cst_52 = arith.constant 0.000000e+00 : f32
      %322 = vector.broadcast %cst_52 : f32 to vector<1x256xf32>
      %323 = vector.broadcast %67 : f32 to vector<1x256xf32>
      %324 = arith.mulf %323, %146 : vector<1x256xf32>
      %325 = arith.addf %322, %324 : vector<1x256xf32>
      %326 = vector.broadcast %116 : f32 to vector<1x256xf32>
      %327 = arith.mulf %326, %164 : vector<1x256xf32>
      %328 = arith.addf %325, %327 : vector<1x256xf32>
      %329 = vector.broadcast %68 : f32 to vector<1x256xf32>
      %330 = arith.mulf %329, %149 : vector<1x256xf32>
      %331 = arith.addf %328, %330 : vector<1x256xf32>
      %332 = vector.broadcast %117 : f32 to vector<1x256xf32>
      %333 = arith.mulf %332, %167 : vector<1x256xf32>
      %334 = arith.addf %331, %333 : vector<1x256xf32>
      %335 = vector.broadcast %69 : f32 to vector<1x256xf32>
      %336 = arith.mulf %335, %152 : vector<1x256xf32>
      %337 = arith.addf %334, %336 : vector<1x256xf32>
      %338 = vector.broadcast %118 : f32 to vector<1x256xf32>
      %339 = arith.mulf %338, %170 : vector<1x256xf32>
      %340 = arith.addf %337, %339 : vector<1x256xf32>
      %341 = vector.broadcast %70 : f32 to vector<1x256xf32>
      %342 = arith.mulf %341, %17 : vector<1x256xf32>
      %343 = arith.addf %340, %342 : vector<1x256xf32>
      %344 = vector.broadcast %119 : f32 to vector<1x256xf32>
      %345 = arith.mulf %344, %18 : vector<1x256xf32>
      %346 = arith.addf %343, %345 : vector<1x256xf32>
      %347 = vector.broadcast %71 : f32 to vector<1x256xf32>
      %348 = arith.mulf %347, %155 : vector<1x256xf32>
      %349 = arith.addf %346, %348 : vector<1x256xf32>
      %350 = vector.broadcast %120 : f32 to vector<1x256xf32>
      %351 = arith.mulf %350, %173 : vector<1x256xf32>
      %352 = arith.addf %349, %351 : vector<1x256xf32>
      %353 = vector.broadcast %72 : f32 to vector<1x256xf32>
      %354 = arith.mulf %353, %158 : vector<1x256xf32>
      %355 = arith.addf %352, %354 : vector<1x256xf32>
      %356 = vector.broadcast %121 : f32 to vector<1x256xf32>
      %357 = arith.mulf %356, %176 : vector<1x256xf32>
      %358 = arith.addf %355, %357 : vector<1x256xf32>
      %359 = vector.broadcast %73 : f32 to vector<1x256xf32>
      %360 = arith.mulf %359, %161 : vector<1x256xf32>
      %361 = arith.addf %358, %360 : vector<1x256xf32>
      %362 = vector.broadcast %122 : f32 to vector<1x256xf32>
      %363 = arith.mulf %362, %179 : vector<1x256xf32>
      %364 = arith.addf %361, %363 : vector<1x256xf32>
      %365 = arith.addf %321, %364 : vector<1x256xf32>
      %cst_53 = arith.constant 0.000000e+00 : f32
      %366 = vector.broadcast %cst_53 : f32 to vector<1x256xf32>
      %367 = vector.broadcast %74 : f32 to vector<1x256xf32>
      %368 = arith.mulf %367, %146 : vector<1x256xf32>
      %369 = arith.addf %366, %368 : vector<1x256xf32>
      %370 = vector.broadcast %123 : f32 to vector<1x256xf32>
      %371 = arith.mulf %370, %164 : vector<1x256xf32>
      %372 = arith.addf %369, %371 : vector<1x256xf32>
      %373 = vector.broadcast %75 : f32 to vector<1x256xf32>
      %374 = arith.mulf %373, %149 : vector<1x256xf32>
      %375 = arith.addf %372, %374 : vector<1x256xf32>
      %376 = vector.broadcast %124 : f32 to vector<1x256xf32>
      %377 = arith.mulf %376, %167 : vector<1x256xf32>
      %378 = arith.addf %375, %377 : vector<1x256xf32>
      %379 = vector.broadcast %76 : f32 to vector<1x256xf32>
      %380 = arith.mulf %379, %152 : vector<1x256xf32>
      %381 = arith.addf %378, %380 : vector<1x256xf32>
      %382 = vector.broadcast %125 : f32 to vector<1x256xf32>
      %383 = arith.mulf %382, %170 : vector<1x256xf32>
      %384 = arith.addf %381, %383 : vector<1x256xf32>
      %385 = vector.broadcast %77 : f32 to vector<1x256xf32>
      %386 = arith.mulf %385, %17 : vector<1x256xf32>
      %387 = arith.addf %384, %386 : vector<1x256xf32>
      %388 = vector.broadcast %126 : f32 to vector<1x256xf32>
      %389 = arith.mulf %388, %18 : vector<1x256xf32>
      %390 = arith.addf %387, %389 : vector<1x256xf32>
      %391 = vector.broadcast %78 : f32 to vector<1x256xf32>
      %392 = arith.mulf %391, %155 : vector<1x256xf32>
      %393 = arith.addf %390, %392 : vector<1x256xf32>
      %394 = vector.broadcast %127 : f32 to vector<1x256xf32>
      %395 = arith.mulf %394, %173 : vector<1x256xf32>
      %396 = arith.addf %393, %395 : vector<1x256xf32>
      %397 = vector.broadcast %79 : f32 to vector<1x256xf32>
      %398 = arith.mulf %397, %158 : vector<1x256xf32>
      %399 = arith.addf %396, %398 : vector<1x256xf32>
      %400 = vector.broadcast %128 : f32 to vector<1x256xf32>
      %401 = arith.mulf %400, %176 : vector<1x256xf32>
      %402 = arith.addf %399, %401 : vector<1x256xf32>
      %403 = vector.broadcast %80 : f32 to vector<1x256xf32>
      %404 = arith.mulf %403, %161 : vector<1x256xf32>
      %405 = arith.addf %402, %404 : vector<1x256xf32>
      %406 = vector.broadcast %129 : f32 to vector<1x256xf32>
      %407 = arith.mulf %406, %179 : vector<1x256xf32>
      %408 = arith.addf %405, %407 : vector<1x256xf32>
      %c240_i32_54 = arith.constant 240 : i32
      %409 = tpu.dynamic_rotate %408 by %c240_i32_54 dim 1 : vector<1x256xf32>, i32 -> vector<1x256xf32>
      %cst_55 = arith.constant 0.000000e+00 : f32
      %410 = vector.broadcast %cst_55 : f32 to vector<1x256xf32>
      %411 = arith.select %41, %409, %410 : vector<1x256xi1>, vector<1x256xf32>
      %412 = arith.addf %365, %411 : vector<1x256xf32>
      %cst_56 = arith.constant 0.000000e+00 : f32
      %413 = vector.broadcast %cst_56 : f32 to vector<1x256xf32>
      %414 = vector.broadcast %81 : f32 to vector<1x256xf32>
      %415 = arith.mulf %414, %146 : vector<1x256xf32>
      %416 = arith.addf %413, %415 : vector<1x256xf32>
      %417 = vector.broadcast %130 : f32 to vector<1x256xf32>
      %418 = arith.mulf %417, %164 : vector<1x256xf32>
      %419 = arith.addf %416, %418 : vector<1x256xf32>
      %420 = vector.broadcast %82 : f32 to vector<1x256xf32>
      %421 = arith.mulf %420, %149 : vector<1x256xf32>
      %422 = arith.addf %419, %421 : vector<1x256xf32>
      %423 = vector.broadcast %131 : f32 to vector<1x256xf32>
      %424 = arith.mulf %423, %167 : vector<1x256xf32>
      %425 = arith.addf %422, %424 : vector<1x256xf32>
      %426 = vector.broadcast %83 : f32 to vector<1x256xf32>
      %427 = arith.mulf %426, %152 : vector<1x256xf32>
      %428 = arith.addf %425, %427 : vector<1x256xf32>
      %429 = vector.broadcast %132 : f32 to vector<1x256xf32>
      %430 = arith.mulf %429, %170 : vector<1x256xf32>
      %431 = arith.addf %428, %430 : vector<1x256xf32>
      %432 = vector.broadcast %84 : f32 to vector<1x256xf32>
      %433 = arith.mulf %432, %17 : vector<1x256xf32>
      %434 = arith.addf %431, %433 : vector<1x256xf32>
      %435 = vector.broadcast %133 : f32 to vector<1x256xf32>
      %436 = arith.mulf %435, %18 : vector<1x256xf32>
      %437 = arith.addf %434, %436 : vector<1x256xf32>
      %438 = vector.broadcast %85 : f32 to vector<1x256xf32>
      %439 = arith.mulf %438, %155 : vector<1x256xf32>
      %440 = arith.addf %437, %439 : vector<1x256xf32>
      %441 = vector.broadcast %134 : f32 to vector<1x256xf32>
      %442 = arith.mulf %441, %173 : vector<1x256xf32>
      %443 = arith.addf %440, %442 : vector<1x256xf32>
      %444 = vector.broadcast %86 : f32 to vector<1x256xf32>
      %445 = arith.mulf %444, %158 : vector<1x256xf32>
      %446 = arith.addf %443, %445 : vector<1x256xf32>
      %447 = vector.broadcast %135 : f32 to vector<1x256xf32>
      %448 = arith.mulf %447, %176 : vector<1x256xf32>
      %449 = arith.addf %446, %448 : vector<1x256xf32>
      %450 = vector.broadcast %87 : f32 to vector<1x256xf32>
      %451 = arith.mulf %450, %161 : vector<1x256xf32>
      %452 = arith.addf %449, %451 : vector<1x256xf32>
      %453 = vector.broadcast %136 : f32 to vector<1x256xf32>
      %454 = arith.mulf %453, %179 : vector<1x256xf32>
      %455 = arith.addf %452, %454 : vector<1x256xf32>
      %c224_i32_57 = arith.constant 224 : i32
      %456 = tpu.dynamic_rotate %455 by %c224_i32_57 dim 1 : vector<1x256xf32>, i32 -> vector<1x256xf32>
      %cst_58 = arith.constant 0.000000e+00 : f32
      %457 = vector.broadcast %cst_58 : f32 to vector<1x256xf32>
      %458 = arith.select %43, %456, %457 : vector<1x256xi1>, vector<1x256xf32>
      %459 = arith.addf %412, %458 : vector<1x256xf32>
      %cst_59 = arith.constant 0.000000e+00 : f32
      %460 = vector.broadcast %cst_59 : f32 to vector<1x256xf32>
      %461 = vector.broadcast %88 : f32 to vector<1x256xf32>
      %462 = arith.mulf %461, %146 : vector<1x256xf32>
      %463 = arith.addf %460, %462 : vector<1x256xf32>
      %464 = vector.broadcast %137 : f32 to vector<1x256xf32>
      %465 = arith.mulf %464, %164 : vector<1x256xf32>
      %466 = arith.addf %463, %465 : vector<1x256xf32>
      %467 = vector.broadcast %89 : f32 to vector<1x256xf32>
      %468 = arith.mulf %467, %149 : vector<1x256xf32>
      %469 = arith.addf %466, %468 : vector<1x256xf32>
      %470 = vector.broadcast %138 : f32 to vector<1x256xf32>
      %471 = arith.mulf %470, %167 : vector<1x256xf32>
      %472 = arith.addf %469, %471 : vector<1x256xf32>
      %473 = vector.broadcast %90 : f32 to vector<1x256xf32>
      %474 = arith.mulf %473, %152 : vector<1x256xf32>
      %475 = arith.addf %472, %474 : vector<1x256xf32>
      %476 = vector.broadcast %139 : f32 to vector<1x256xf32>
      %477 = arith.mulf %476, %170 : vector<1x256xf32>
      %478 = arith.addf %475, %477 : vector<1x256xf32>
      %479 = vector.broadcast %91 : f32 to vector<1x256xf32>
      %480 = arith.mulf %479, %17 : vector<1x256xf32>
      %481 = arith.addf %478, %480 : vector<1x256xf32>
      %482 = vector.broadcast %140 : f32 to vector<1x256xf32>
      %483 = arith.mulf %482, %18 : vector<1x256xf32>
      %484 = arith.addf %481, %483 : vector<1x256xf32>
      %485 = vector.broadcast %92 : f32 to vector<1x256xf32>
      %486 = arith.mulf %485, %155 : vector<1x256xf32>
      %487 = arith.addf %484, %486 : vector<1x256xf32>
      %488 = vector.broadcast %141 : f32 to vector<1x256xf32>
      %489 = arith.mulf %488, %173 : vector<1x256xf32>
      %490 = arith.addf %487, %489 : vector<1x256xf32>
      %491 = vector.broadcast %93 : f32 to vector<1x256xf32>
      %492 = arith.mulf %491, %158 : vector<1x256xf32>
      %493 = arith.addf %490, %492 : vector<1x256xf32>
      %494 = vector.broadcast %142 : f32 to vector<1x256xf32>
      %495 = arith.mulf %494, %176 : vector<1x256xf32>
      %496 = arith.addf %493, %495 : vector<1x256xf32>
      %497 = vector.broadcast %94 : f32 to vector<1x256xf32>
      %498 = arith.mulf %497, %161 : vector<1x256xf32>
      %499 = arith.addf %496, %498 : vector<1x256xf32>
      %500 = vector.broadcast %143 : f32 to vector<1x256xf32>
      %501 = arith.mulf %500, %179 : vector<1x256xf32>
      %502 = arith.addf %499, %501 : vector<1x256xf32>
      %c208_i32_60 = arith.constant 208 : i32
      %503 = tpu.dynamic_rotate %502 by %c208_i32_60 dim 1 : vector<1x256xf32>, i32 -> vector<1x256xf32>
      %cst_61 = arith.constant 0.000000e+00 : f32
      %504 = vector.broadcast %cst_61 : f32 to vector<1x256xf32>
      %505 = arith.select %45, %503, %504 : vector<1x256xi1>, vector<1x256xf32>
      %506 = arith.addf %459, %505 : vector<1x256xf32>
      %cst_62 = arith.constant 0.000000e+00 : f32
      %507 = vector.broadcast %cst_62 : f32 to vector<1x256xf32>
      %508 = arith.subf %507, %506 : vector<1x256xf32>
      %509 = math.exp %508 : vector<1x256xf32>
      %cst_63 = arith.constant 1.000000e+00 : f32
      %510 = vector.broadcast %cst_63 : f32 to vector<1x256xf32>
      %511 = arith.addf %510, %509 : vector<1x256xf32>
      %512 = tpu.reciprocal %511 {approx = true} : vector<1x256xf32> -> vector<1x256xf32>
      %513 = arith.mulf %506, %512 : vector<1x256xf32>
      %c0_64 = arith.constant 0 : index
      %c0_65 = arith.constant 0 : index
      %c0_66 = arith.constant 0 : index
      %514 = vector.load %arg4[%c0_64, %c0_65, %c0_66] : memref<1x1x256xf32, #tpu.memory_space<vmem>>, vector<1x1x256xf32>
      %515 = vector.shape_cast %514 : vector<1x1x256xf32> to vector<1x256xf32>
      %516 = vector.shape_cast %513 : vector<1x256xf32> to vector<1x1x256xf32>
      tpu.vector_store %arg4[%c0_64, %c0_65, %c0_66], %516 {strides = array<i32>} : memref<1x1x256xf32, #tpu.memory_space<vmem>>, vector<1x1x256xf32>,
    } else {
    }
    return
  }
  func.func @transform_0(%arg0: i32, %arg1: i32) -> i32 {
    %c0_i32 = arith.constant 0 : i32
    %c0_i32_0 = arith.constant 0 : i32
    return %c0_i32 : i32
  }
  func.func @transform_1(%arg0: i32, %arg1: i32) -> (i32, i32, i32) {
    %c0_i32 = arith.constant 0 : i32
    %c0_i32_0 = arith.constant 0 : i32
    return %arg0, %arg1, %c0_i32 : i32, i32, i32
  }
  func.func @transform_2(%arg0: i32, %arg1: i32) -> (i32, i32, i32) {
    %c0_i32 = arith.constant 0 : i32
    %c0_i32_0 = arith.constant 0 : i32
    %c0_i32_1 = arith.constant 0 : i32
    return %arg0, %c0_i32, %c0_i32_0 : i32, i32, i32
  }
}

</mosaic_0001>

<llo_original>
// kernel: tpu_custom_call.1
$region0: #{tpu_custom_call.1}
  #allocation0 [shape = 'u32[]', space=smem, size = 0x4, offset = 0x4, fixed_abs, tag = 'smem constant byte address 0x4 - core index']
  #allocation1 [shape = 'u32[72,128]{1,0:T(1,128)}', space=vmem, size = 0x9000, scoped, tag = 'internal scratch']
  #allocation2 [shape = 'f32[1,256]{1,0:T(1,128)}', space=vmem, size = 0x400, scoped, tag = 'scratch operand']
  #allocation3 [shape = 'f32[1,256]{1,0:T(1,128)}', space=vmem, size = 0x400, scoped, tag = 'scratch operand']
  %s0 = inlined_call_operand.hbm [shape: f32[98], index: 0, kind: input, shape index: {}]
  %s1 = inlined_call_operand.hbm [shape: f32[2,4,256], index: 1, kind: input, shape index: {}]
  %s2 = inlined_call_operand.hbm [shape: f32[2,1,256], index: 2, kind: output, shape index: {}]
  %s3 = sld [smem:[#allocation0]]
  $region57: #{tpu_custom_call.1} parent=0
    _
  %s5 = ssub.s32 1, %s3
  %s6 = scalar_select 0, %s5, %s3
  $region1: #{tpu_custom_call.1} parent=0
    #allocation4 [shape = 'u8[512]{0}', space=smem, size = 0x200, scoped, tag = 'input window, operand 0, single buffered']
    #allocation5 [shape = 's32[2]{0}', space=sflag, size = 0x8, scoped, tag = 'scoped memory for tpu_custom_call.1']
    #allocation6 [shape = 's32[2]{0}', space=sflag, size = 0x8, scoped, tag = 'scoped memory for tpu_custom_call.1']
    #allocation7 [shape = 's32[2]{0}', space=sflag, size = 0x8, scoped, tag = 'scoped memory for tpu_custom_call.1']
    #allocation8 [shape = 'u8[8192]{0}', space=vmem, size = 0x2000, scoped, tag = 'input window, operand 1']
    #allocation9 [shape = 'u8[2048]{0}', space=vmem, size = 0x800, scoped, tag = 'output window, operand 0']
    %7 = vsyncpa [#allocation7], 0
    %8 = vsyncpa [#allocation5], 0
    %s9 = scalar_lea.sflag [#allocation5], 1
    %10 = vsyncpa %s9, 0
    %11 = vsyncpa [#allocation6], 0
    %s12 = scalar_lea.sflag [#allocation6], 1
    %13 = vsyncpa %s12, 0
    loop: start=0, step=1, limit=4
    $region2: #{tpu_custom_call.1} parent=1 // loop_pre_header
      _
    $region3: #{tpu_custom_call.1} parent=1 // loop_header
      %s15 = sphi 0, %s19
      %p16 = scmp.ge.s32.totalorder %s15, 4
      %s22 = sphi 0, %s34
      %s23 = sphi 0, %s30
      %s24 = sphi 0, %s22
      %s25 = sphi 0, %s23
      %s26 = sphi 0, %s24
      %s27 = sphi 0, %s25
      %s35 = sphi 0, %s35
      %s37 = sphi 0, %s35
      %s38 = sphi 0, %s37
      %s52 = sphi 0, %s38
      %s60 = sphi 0, %s62
      %s63 = sphi 0, %s60
      %s64 = sphi 0, %s63
      %s80 = sphi 0, %s64
      %s86 = sphi 0, %s88
      %s89 = sphi 0, %s86
      %s90 = sphi 0, %s89
      %s106 = sphi 0, %s90
    $region4: #{tpu_custom_call.1} parent=1 // loop_header_branch
      %18 = sbr.rel (%p16) target = $region8
    $region5: #{tpu_custom_call.1} parent=1 // loop_body
      %s20 = ssub.s32 %s15, 1
      %s21 = ssub.s32 %s15, 2
      %s28 = sadd.s32 1, %s23
      %p29 = scmp.ge.s32.totalorder %s28, 1
      %s30 = scalar_select %p29, 0, %s28
      %s31 = sadd.s32 1, %s22
      %s32 = scalar_select %p29, %s31, %s22
      %p33 = scmp.ge.s32.totalorder %s32, 2
      %s34 = scalar_select %p33, 0, %s32
      %s36 = sadd.s32 %s35, 1
      %p39 = scmp.eq.s32.totalorder %s15, 1
      %p40 = scmp.ne.s32.totalorder %s35, %s37
      %p41 = scmp.eq.s32.totalorder %s15, 0
      %p42 = por %p40, %p41
      %p43 = scmp.ne.s32.totalorder %s35, %s37
      %p44 = scmp.eq.s32.totalorder %s20, 1
      %p45 = por %p43, %p44
      %p46 = scmp.ne.s32.totalorder %s37, %s38
      %p47 = scmp.eq.s32.totalorder %s20, 0
      %p48 = por %p46, %p47
      %p49 = scmp.ne.s32.totalorder %s37, %s38
      %p50 = scmp.eq.s32.totalorder %s21, 1
      %p51 = por %p49, %p50
      %p53 = scmp.ne.s32.totalorder %s38, %s52
      %p54 = scmp.eq.s32.totalorder %s21, 0
      %p55 = por %p53, %p54
      %s56 = ssub.s32 %s22, %s34
      %s57 = ssub.s32 %s23, %s30
      %s58 = sor.u32 %s56, %s57
      %p59 = scmp.eq.s32.totalorder %s58, 0
      %s61 = sadd.s32 %s60, 1
      %s62 = scalar_select %p59, %s60, %s61
      %p65 = pneg %p59
      %p66 = scmp.eq.s32.totalorder %s15, 1
      %p67 = por %p65, %p66
      %p68 = scmp.ne.s32.totalorder %s60, %s63
      %p69 = scmp.eq.s32.totalorder %s15, 0
      %p70 = por %p68, %p69
      %p71 = scmp.ne.s32.totalorder %s60, %s63
      %p72 = scmp.eq.s32.totalorder %s20, 1
      %p73 = por %p71, %p72
      %p74 = scmp.ne.s32.totalorder %s63, %s64
      %p75 = scmp.eq.s32.totalorder %s20, 0
      %p76 = por %p74, %p75
      %p77 = scmp.ne.s32.totalorder %s63, %s64
      %p78 = scmp.eq.s32.totalorder %s21, 1
      %p79 = por %p77, %p78
      %p81 = scmp.ne.s32.totalorder %s64, %s80
      %p82 = scmp.eq.s32.totalorder %s21, 0
      %p83 = por %p81, %p82
      %s84 = ssub.s32 %s22, %s34
      %p85 = scmp.eq.s32.totalorder %s84, 0
      %s87 = sadd.s32 %s86, 1
      %s88 = scalar_select %p85, %s86, %s87
      %p91 = pneg %p85
      %p92 = scmp.eq.s32.totalorder %s15, 1
      %p93 = por %p91, %p92
      %p94 = scmp.ne.s32.totalorder %s86, %s89
      %p95 = scmp.eq.s32.totalorder %s15, 0
      %p96 = por %p94, %p95
      %p97 = scmp.ne.s32.totalorder %s86, %s89
      %p98 = scmp.eq.s32.totalorder %s20, 1
      %p99 = por %p97, %p98
      %p100 = scmp.ne.s32.totalorder %s89, %s90
      %p101 = scmp.eq.s32.totalorder %s20, 0
      %p102 = por %p100, %p101
      %p103 = scmp.ne.s32.totalorder %s89, %s90
      %p104 = scmp.eq.s32.totalorder %s21, 1
      %p105 = por %p103, %p104
      %p107 = scmp.ne.s32.totalorder %s90, %s106
      %p108 = scmp.eq.s32.totalorder %s21, 0
      %p109 = por %p107, %p108
      %p110 = scmp.le.s32.totalorder 1, %s15
      %p111 = scmp.lt.s32.totalorder %s15, 3
      %p112 = pnand %p110, %p111
      %p113 = pneg %p112
      // Predicated region
      $region9: #{tpu_custom_call.1} parent=5 // pred_check
        _
      $region10: #{tpu_custom_call.1} parent=5 // pred_check_branch
        %115 = sbr.rel (%p112) target = $region12
      $region11: #{tpu_custom_call.1} parent=5 // pred_region
        %s116 = ssub.s32 %s15, 1
        // Predicated region
        $region13: #{tpu_custom_call.1} parent=11 // pred_check
          %p117 = pneg %p48
        $region14: #{tpu_custom_call.1} parent=11 // pred_check_branch
          %119 = sbr.rel (%p117) target = $region16
        $region15: #{tpu_custom_call.1} parent=11 // pred_region
          %121 = vsyncadd [#allocation7], 0
          %s123 = sshll.u32 %s0, 4
          %s124 = int_to_ptr.hbm [resolvable:$true] %s123
          %126 = dma.hbm_to_smem %s124, 16, [#allocation4], [#allocation7]
        $region16: #{tpu_custom_call.1} parent=11 // pred_fallthru
          _
      $region12: #{tpu_custom_call.1} parent=5 // pred_fallthru
        _
      %p127 = scmp.lt.s32.totalorder %s15, 2
      // Predicated region
      $region17: #{tpu_custom_call.1} parent=5 // pred_check
        %p128 = pneg %p127
      $region18: #{tpu_custom_call.1} parent=5 // pred_check_branch
        %130 = sbr.rel (%p128) target = $region20
      $region19: #{tpu_custom_call.1} parent=5 // pred_region
        // Predicated region
        $region21: #{tpu_custom_call.1} parent=19 // pred_check
          %p131 = pneg %p70
        $region22: #{tpu_custom_call.1} parent=19 // pred_check_branch
          %133 = sbr.rel (%p131) target = $region24
        $region23: #{tpu_custom_call.1} parent=19 // pred_region
          %s134 = sand.u32 %s60, 1
          %s135 = scalar_lea.sflag [#allocation5], %s134
          %s136 = sand.u32 %s60, 1
          %s137 = smul.addr %s136, 8
          %s138 = scalar_lea.vmem [#allocation8], %s137
          %140 = vsyncadd %s135, 0
          %s141 = smul.addr %s23, 2
          %s142 = smul.addr %s22, 2
          %s143 = sadd.s32 %s141, %s142
          %s144 = smul.addr %s143, 4
          %s145 = scalar_lea.hbm %s1, %s144
          %s147 = sshll.u32 %s145, 4
          %s148 = int_to_ptr.hbm [resolvable:$true] %s147
          %s149 = sshll.u32 %s138, 4
          %s150 = int_to_ptr.vmem [resolvable:$true] %s149
          %152 = dma.hbm_to_vmem [thread:$0]  %s148, 128, %s150, %s135
        $region24: #{tpu_custom_call.1} parent=19 // pred_fallthru
          _
      $region20: #{tpu_custom_call.1} parent=5 // pred_fallthru
        _
      %p153 = scmp.le.s32.totalorder 1, %s15
      %p154 = scmp.lt.s32.totalorder %s15, 3
      %p155 = pnand %p153, %p154
      %p156 = pneg %p155
      // Predicated region
      $region25: #{tpu_custom_call.1} parent=5 // pred_check
        _
      $region26: #{tpu_custom_call.1} parent=5 // pred_check_branch
        %158 = sbr.rel (%p155) target = $region28
      $region27: #{tpu_custom_call.1} parent=5 // pred_region
        %s159 = ssub.s32 %s15, 1
        // Predicated region
        $region29: #{tpu_custom_call.1} parent=27 // pred_check
          %p160 = pneg %p48
        $region30: #{tpu_custom_call.1} parent=27 // pred_check_branch
          %162 = sbr.rel (%p160) target = $region32
        $region31: #{tpu_custom_call.1} parent=27 // pred_region
          %164 = dma.done [#allocation7], 16
        $region32: #{tpu_custom_call.1} parent=27 // pred_fallthru
          _
        %s165 = sand.u32 %s63, 1
        %s166 = scalar_lea.sflag [#allocation5], %s165
        %s167 = sand.u32 %s63, 1
        %s168 = smul.addr %s167, 8
        %s169 = scalar_lea.vmem [#allocation8], %s168
        // Predicated region
        $region33: #{tpu_custom_call.1} parent=27 // pred_check
          %p170 = pneg %p76
        $region34: #{tpu_custom_call.1} parent=27 // pred_check_branch
          %172 = sbr.rel (%p170) target = $region36
        $region35: #{tpu_custom_call.1} parent=27 // pred_region
          %174 = dma.done %s166, 128
        $region36: #{tpu_custom_call.1} parent=27 // pred_fallthru
          _
        %175 = sfence
        %p176 = pneg %p48
        %p177 = pneg %p45
        %s178 = sand.u32 %s63, 1
        %s179 = scalar_lea.sflag [#allocation5], %s178
        %s180 = sand.u32 %s63, 1
        %s181 = smul.addr %s180, 8
        %s182 = scalar_lea.vmem [#allocation8], %s181
        %p183 = pneg %p76
        %p184 = pneg %p73
        %p185 = pneg %p102
        %p186 = pneg %p99
        %s187 = sand.u32 %s89, 1
        %s188 = scalar_lea.sflag [#allocation6], %s187
        %s189 = sand.u32 %s89, 1
        %s190 = smul.addr %s189, 2
        %s191 = scalar_lea.vmem [#allocation9], %s190
        %p192 = scmp.eq.s32.totalorder %s25, 0
        // Predicated region
        $region37: #{tpu_custom_call.1} parent=27 // pred_check
          %p193 = pneg %p192
        $region38: #{tpu_custom_call.1} parent=27 // pred_check_branch
          %195 = sbr.rel (%p193) target = $region40
        $region39: #{tpu_custom_call.1} parent=27 // pred_region
          %v196 = vlaneseq
          %vm197 = vcmp.ge.s32.totalorder %v196, 0
          %vm198 = vcmp.lt.s32.totalorder %v196, 256
          %vm199 = vmand %vm197, %vm198
          %200 = vst.msk [vmem:[#allocation2] sm:$0x3] %vm199, 0.0
          %201 = vst.msk [vmem:[#allocation3] sm:$0x3] %vm199, -inf
        $region40: #{tpu_custom_call.1} parent=27 // pred_fallthru
          _
        %v202 = vld [vmem:[%s169] sm:$0xff]
        %v203 = vld [vmem:[#allocation2] sm:$0x3]
        %205 = vst [vmem:[#allocation1] ss:$2 sm:$0xff] %v202
        %v206 = vld.sshfl [vmem:[#allocation1] sm:$0xff pattern:$0x75316420]
        %v207 = vld.sshfl [vmem:[#allocation1 + $0x8] sm:$0xff pattern:$0x75316420]
        %vm210 = vcmask 1043456
        %v211 = vsel %vm210, %v206, 0.0
        %v212 = vrot.slane %v211, 4
        %v213 = vadd.f32 %v211, %v212
        %v214 = vrot.slane %v213, 2
        %v215 = vadd.f32 %v213, %v214
        %v216 = vrot.slane %v215, 1
        %v217 = vadd.f32 %v215, %v216
        %v218 = vsel %vm210, %v207, 0.0
        %v219 = vrot.slane %v218, 4
        %v220 = vadd.f32 %v218, %v219
        %v221 = vrot.slane %v220, 2
        %v222 = vadd.f32 %v220, %v221
        %v223 = vrot.slane %v222, 1
        %v224 = vadd.f32 %v222, %v223
        %v227 = vrot.slane %v224, 7
        %vm228 = vcmask 1040384
        %v229 = vsel %vm228, %v217, %v227
        %v231 = vadd.f32 %v203, %v229
        %v232 = vlaneseq
        %vm233 = vcmp.ge.s32.totalorder %v232, 0
        %vm234 = vcmp.lt.s32.totalorder %v232, 256
        %vm235 = vmand %vm233, %vm234
        %236 = vst.msk [vmem:[#allocation2] sm:$0x3] %vm235, %v231
        %v237 = vld [vmem:[#allocation3] sm:$0x3]
        %238 = vst [vmem:[#allocation1] ss:$2 sm:$0xff] %v202
        %v239 = vld.sshfl [vmem:[#allocation1] sm:$0xff pattern:$0x75316420]
        %v240 = vld.sshfl [vmem:[#allocation1 + $0x8] sm:$0xff pattern:$0x75316420]
        %v243 = vsel %vm210, %v239, -inf
        %v244 = vrot.slane %v243, 4
        %v245 = vmax.f32 %v243, %v244
        %v246 = vrot.slane %v245, 2
        %v247 = vmax.f32 %v245, %v246
        %v248 = vrot.slane %v247, 1
        %v249 = vmax.f32 %v247, %v248
        %v250 = vsel %vm210, %v240, -inf
        %v251 = vrot.slane %v250, 4
        %v252 = vmax.f32 %v250, %v251
        %v253 = vrot.slane %v252, 2
        %v254 = vmax.f32 %v252, %v253
        %v255 = vrot.slane %v254, 1
        %v256 = vmax.f32 %v254, %v255
        %v259 = vrot.slane %v256, 7
        %v260 = vsel %vm228, %v249, %v259
        %v262 = vmax.f32 %v237, %v260
        %263 = vst.msk [vmem:[#allocation3] sm:$0x3] %vm235, %v262
        // Predicated region
        $region41: #{tpu_custom_call.1} parent=27 // pred_check
          %p264 = pneg %p192
        $region42: #{tpu_custom_call.1} parent=27 // pred_check_branch
          %266 = sbr.rel (%p264) target = $region44
        $region43: #{tpu_custom_call.1} parent=27 // pred_region
          %v267 = vld [vmem:[#allocation2] sm:$0x3]
          %v268 = vmul.f32 %v267, 0.25
          %v269 = vld [vmem:[#allocation3] sm:$0x3]
          %v270 = vlaneseq
          %v271 = vand.u32 %v270, 127
          %v272 = vadd.s32 %v271, 128
          %v273 = vand.u32 %v271, 15
          %v274 = vand.u32 %v272, 15
          %vm275 = vcmp.ge.s32.totalorder %v273, 3
          %vm276 = vcmp.ge.s32.totalorder %v274, 3
          %vm277 = vcmp.ge.s32.totalorder %v273, 2
          %vm278 = vcmp.ge.s32.totalorder %v274, 2
          %vm279 = vcmp.ge.s32.totalorder %v273, 1
          %vm280 = vcmp.ge.s32.totalorder %v274, 1
          %vm281 = vcmp.lt.s32.totalorder %v273, 15
          %vm282 = vcmp.lt.s32.totalorder %v274, 15
          %vm283 = vcmp.lt.s32.totalorder %v273, 14
          %vm284 = vcmp.lt.s32.totalorder %v274, 14
          %vm285 = vcmp.lt.s32.totalorder %v273, 13
          %vm286 = vcmp.lt.s32.totalorder %v274, 13
          %vm287 = vcmp.ge.s32.totalorder %v271, 48
          %vm288 = vcmp.ge.s32.totalorder %v272, 48
          %vm289 = vcmp.ge.s32.totalorder %v271, 32
          %vm290 = vcmp.ge.s32.totalorder %v272, 32
          %vm291 = vcmp.ge.s32.totalorder %v271, 16
          %vm292 = vcmp.ge.s32.totalorder %v272, 16
          %vm293 = vcmp.lt.s32.totalorder %v271, 240
          %vm294 = vcmp.lt.s32.totalorder %v272, 240
          %vm295 = vcmp.lt.s32.totalorder %v271, 224
          %vm296 = vcmp.lt.s32.totalorder %v272, 224
          %vm297 = vcmp.lt.s32.totalorder %v271, 208
          %vm298 = vcmp.lt.s32.totalorder %v272, 208
          %s299 = sld [smem:[#allocation4]]
          %s300 = sld [smem:[#allocation4 + $0x1]]
          %s301 = sld [smem:[#allocation4 + $0x2]]
          %s302 = sld [smem:[#allocation4 + $0x3]]
          %s303 = sld [smem:[#allocation4 + $0x4]]
          %s304 = sld [smem:[#allocation4 + $0x5]]
          %s305 = sld [smem:[#allocation4 + $0x6]]
          %s306 = sld [smem:[#allocation4 + $0x7]]
          %s307 = sld [smem:[#allocation4 + $0x8]]
          %s308 = sld [smem:[#allocation4 + $0x9]]
          %s309 = sld [smem:[#allocation4 + $0xa]]
          %s310 = sld [smem:[#allocation4 + $0xb]]
          %s311 = sld [smem:[#allocation4 + $0xc]]
          %s312 = sld [smem:[#allocation4 + $0xd]]
          %s313 = sld [smem:[#allocation4 + $0xe]]
          %s314 = sld [smem:[#allocation4 + $0xf]]
          %s315 = sld [smem:[#allocation4 + $0x10]]
          %s316 = sld [smem:[#allocation4 + $0x11]]
          %s317 = sld [smem:[#allocation4 + $0x12]]
          %s318 = sld [smem:[#allocation4 + $0x13]]
          %s319 = sld [smem:[#allocation4 + $0x14]]
          %s320 = sld [smem:[#allocation4 + $0x15]]
          %s321 = sld [smem:[#allocation4 + $0x16]]
          %s322 = sld [smem:[#allocation4 + $0x17]]
          %s323 = sld [smem:[#allocation4 + $0x18]]
          %s324 = sld [smem:[#allocation4 + $0x19]]
          %s325 = sld [smem:[#allocation4 + $0x1a]]
          %s326 = sld [smem:[#allocation4 + $0x1b]]
          %s327 = sld [smem:[#allocation4 + $0x1c]]
          %s328 = sld [smem:[#allocation4 + $0x1d]]
          %s329 = sld [smem:[#allocation4 + $0x1e]]
          %s330 = sld [smem:[#allocation4 + $0x1f]]
          %s331 = sld [smem:[#allocation4 + $0x20]]
          %s332 = sld [smem:[#allocation4 + $0x21]]
          %s333 = sld [smem:[#allocation4 + $0x22]]
          %s334 = sld [smem:[#allocation4 + $0x23]]
          %s335 = sld [smem:[#allocation4 + $0x24]]
          %s336 = sld [smem:[#allocation4 + $0x25]]
          %s337 = sld [smem:[#allocation4 + $0x26]]
          %s338 = sld [smem:[#allocation4 + $0x27]]
          %s339 = sld [smem:[#allocation4 + $0x28]]
          %s340 = sld [smem:[#allocation4 + $0x29]]
          %s341 = sld [smem:[#allocation4 + $0x2a]]
          %s342 = sld [smem:[#allocation4 + $0x2b]]
          %s343 = sld [smem:[#allocation4 + $0x2c]]
          %s344 = sld [smem:[#allocation4 + $0x2d]]
          %s345 = sld [smem:[#allocation4 + $0x2e]]
          %s346 = sld [smem:[#allocation4 + $0x2f]]
          %s347 = sld [smem:[#allocation4 + $0x30]]
          %s348 = sld [smem:[#allocation4 + $0x31]]
          %s349 = sld [smem:[#allocation4 + $0x32]]
          %s350 = sld [smem:[#allocation4 + $0x33]]
          %s351 = sld [smem:[#allocation4 + $0x34]]
          %s352 = sld [smem:[#allocation4 + $0x35]]
          %s353 = sld [smem:[#allocation4 + $0x36]]
          %s354 = sld [smem:[#allocation4 + $0x37]]
          %s355 = sld [smem:[#allocation4 + $0x38]]
          %s356 = sld [smem:[#allocation4 + $0x39]]
          %s357 = sld [smem:[#allocation4 + $0x3a]]
          %s358 = sld [smem:[#allocation4 + $0x3b]]
          %s359 = sld [smem:[#allocation4 + $0x3c]]
          %s360 = sld [smem:[#allocation4 + $0x3d]]
          %s361 = sld [smem:[#allocation4 + $0x3e]]
          %s362 = sld [smem:[#allocation4 + $0x3f]]
          %s363 = sld [smem:[#allocation4 + $0x40]]
          %s364 = sld [smem:[#allocation4 + $0x41]]
          %s365 = sld [smem:[#allocation4 + $0x42]]
          %s366 = sld [smem:[#allocation4 + $0x43]]
          %s367 = sld [smem:[#allocation4 + $0x44]]
          %s368 = sld [smem:[#allocation4 + $0x45]]
          %s369 = sld [smem:[#allocation4 + $0x46]]
          %s370 = sld [smem:[#allocation4 + $0x47]]
          %s371 = sld [smem:[#allocation4 + $0x48]]
          %s372 = sld [smem:[#allocation4 + $0x49]]
          %s373 = sld [smem:[#allocation4 + $0x4a]]
          %s374 = sld [smem:[#allocation4 + $0x4b]]
          %s375 = sld [smem:[#allocation4 + $0x4c]]
          %s376 = sld [smem:[#allocation4 + $0x4d]]
          %s377 = sld [smem:[#allocation4 + $0x4e]]
          %s378 = sld [smem:[#allocation4 + $0x4f]]
          %s379 = sld [smem:[#allocation4 + $0x50]]
          %s380 = sld [smem:[#allocation4 + $0x51]]
          %s381 = sld [smem:[#allocation4 + $0x52]]
          %s382 = sld [smem:[#allocation4 + $0x53]]
          %s383 = sld [smem:[#allocation4 + $0x54]]
          %s384 = sld [smem:[#allocation4 + $0x55]]
          %s385 = sld [smem:[#allocation4 + $0x56]]
          %s386 = sld [smem:[#allocation4 + $0x57]]
          %s387 = sld [smem:[#allocation4 + $0x58]]
          %s388 = sld [smem:[#allocation4 + $0x59]]
          %s389 = sld [smem:[#allocation4 + $0x5a]]
          %s390 = sld [smem:[#allocation4 + $0x5b]]
          %s391 = sld [smem:[#allocation4 + $0x5c]]
          %s392 = sld [smem:[#allocation4 + $0x5d]]
          %s393 = sld [smem:[#allocation4 + $0x5e]]
          %s394 = sld [smem:[#allocation4 + $0x5f]]
          %s395 = sld [smem:[#allocation4 + $0x60]]
          %s396 = sld [smem:[#allocation4 + $0x61]]
          %v398 = vperm.slane %v268, 0
          %v399 = vperm.slane %v268, 1
          %402 = vrot.lane.b32.xlu0 %v398, 3
          %v403 = vpop.permute.xlu0 %402
          %404 = vrot.lane.b32.xlu0 %v399, 3
          %v405 = vpop.permute.xlu0 %404
          %vm406 = vcmp.lt.s32.totalorder %v271, 3
          %v407 = vsel %vm406, %v403, %v405
          %v408 = vsel %vm406, %v405, %v403
          %v409 = vsel %vm275, %v408, 0.0
          %v410 = vsel %vm276, %v407, 0.0
          %411 = vrot.lane.b32.xlu0 %v398, 2
          %v412 = vpop.permute.xlu0 %411
          %413 = vrot.lane.b32.xlu0 %v399, 2
          %v414 = vpop.permute.xlu0 %413
          %vm415 = vcmp.lt.s32.totalorder %v271, 2
          %v416 = vsel %vm415, %v412, %v414
          %v417 = vsel %vm415, %v414, %v412
          %v418 = vsel %vm277, %v417, 0.0
          %v419 = vsel %vm278, %v416, 0.0
          %420 = vrot.lane.b32.xlu0 %v398, 1
          %v421 = vpop.permute.xlu0 %420
          %422 = vrot.lane.b32.xlu0 %v399, 1
          %v423 = vpop.permute.xlu0 %422
          %vm424 = vcmp.lt.s32.totalorder %v271, 1
          %v425 = vsel %vm424, %v421, %v423
          %v426 = vsel %vm424, %v423, %v421
          %v427 = vsel %vm279, %v426, 0.0
          %v428 = vsel %vm280, %v425, 0.0
          %429 = vrot.lane.b32.xlu0 %v398, 127
          %v430 = vpop.permute.xlu0 %429
          %431 = vrot.lane.b32.xlu0 %v399, 127
          %v432 = vpop.permute.xlu0 %431
          %vm433 = vcmp.lt.s32.totalorder %v271, 127
          %v434 = vsel %vm433, %v430, %v432
          %v435 = vsel %vm433, %v432, %v430
          %v436 = vsel %vm281, %v434, 0.0
          %v437 = vsel %vm282, %v435, 0.0
          %438 = vrot.lane.b32.xlu0 %v398, 126
          %v439 = vpop.permute.xlu0 %438
          %440 = vrot.lane.b32.xlu0 %v399, 126
          %v441 = vpop.permute.xlu0 %440
          %vm442 = vcmp.lt.s32.totalorder %v271, 126
          %v443 = vsel %vm442, %v439, %v441
          %v444 = vsel %vm442, %v441, %v439
          %v445 = vsel %vm283, %v443, 0.0
          %v446 = vsel %vm284, %v444, 0.0
          %447 = vrot.lane.b32.xlu0 %v398, 125
          %v448 = vpop.permute.xlu0 %447
          %449 = vrot.lane.b32.xlu0 %v399, 125
          %v450 = vpop.permute.xlu0 %449
          %vm451 = vcmp.lt.s32.totalorder %v271, 125
          %v452 = vsel %vm451, %v448, %v450
          %v453 = vsel %vm451, %v450, %v448
          %v454 = vsel %vm285, %v452, 0.0
          %v455 = vsel %vm286, %v453, 0.0
          %v457 = vperm.slane %v269, 0
          %v458 = vperm.slane %v269, 1
          %461 = vrot.lane.b32.xlu0 %v457, 3
          %v462 = vpop.permute.xlu0 %461
          %463 = vrot.lane.b32.xlu0 %v458, 3
          %v464 = vpop.permute.xlu0 %463
          %v465 = vsel %vm406, %v462, %v464
          %v466 = vsel %vm406, %v464, %v462
          %v467 = vsel %vm275, %v466, 0.0
          %v468 = vsel %vm276, %v465, 0.0
          %469 = vrot.lane.b32.xlu0 %v457, 2
          %v470 = vpop.permute.xlu0 %469
          %471 = vrot.lane.b32.xlu0 %v458, 2
          %v472 = vpop.permute.xlu0 %471
          %v473 = vsel %vm415, %v470, %v472
          %v474 = vsel %vm415, %v472, %v470
          %v475 = vsel %vm277, %v474, 0.0
          %v476 = vsel %vm278, %v473, 0.0
          %477 = vrot.lane.b32.xlu0 %v457, 1
          %v478 = vpop.permute.xlu0 %477
          %479 = vrot.lane.b32.xlu0 %v458, 1
          %v480 = vpop.permute.xlu0 %479
          %v481 = vsel %vm424, %v478, %v480
          %v482 = vsel %vm424, %v480, %v478
          %v483 = vsel %vm279, %v482, 0.0
          %v484 = vsel %vm280, %v481, 0.0
          %485 = vrot.lane.b32.xlu0 %v457, 127
          %v486 = vpop.permute.xlu0 %485
          %487 = vrot.lane.b32.xlu0 %v458, 127
          %v488 = vpop.permute.xlu0 %487
          %v489 = vsel %vm433, %v486, %v488
          %v490 = vsel %vm433, %v488, %v486
          %v491 = vsel %vm281, %v489, 0.0
          %v492 = vsel %vm282, %v490, 0.0
          %493 = vrot.lane.b32.xlu0 %v457, 126
          %v494 = vpop.permute.xlu0 %493
          %495 = vrot.lane.b32.xlu0 %v458, 126
          %v496 = vpop.permute.xlu0 %495
          %v497 = vsel %vm442, %v494, %v496
          %v498 = vsel %vm442, %v496, %v494
          %v499 = vsel %vm283, %v497, 0.0
          %v500 = vsel %vm284, %v498, 0.0
          %501 = vrot.lane.b32.xlu0 %v457, 125
          %v502 = vpop.permute.xlu0 %501
          %503 = vrot.lane.b32.xlu0 %v458, 125
          %v504 = vpop.permute.xlu0 %503
          %v505 = vsel %vm451, %v502, %v504
          %v506 = vsel %vm451, %v504, %v502
          %v507 = vsel %vm285, %v505, 0.0
          %v508 = vsel %vm286, %v506, 0.0
          %v509 = vstv %s299
          %v510 = vmul.f32 %v509, %v409
          %v511 = vmul.f32 %v509, %v410
          %v512 = vadd.f32 %v510, 0.0
          %v513 = vadd.f32 %v511, 0.0
          %v514 = vstv %s348
          %v515 = vmul.f32 %v514, %v467
          %v516 = vmul.f32 %v514, %v468
          %v517 = vadd.f32 %v512, %v515
          %v518 = vadd.f32 %v513, %v516
          %v519 = vstv %s300
          %v520 = vmul.f32 %v519, %v418
          %v521 = vmul.f32 %v519, %v419
          %v522 = vadd.f32 %v517, %v520
          %v523 = vadd.f32 %v518, %v521
          %v524 = vstv %s349
          %v525 = vmul.f32 %v524, %v475
          %v526 = vmul.f32 %v524, %v476
          %v527 = vadd.f32 %v522, %v525
          %v528 = vadd.f32 %v523, %v526
          %v529 = vstv %s301
          %v530 = vmul.f32 %v529, %v427
          %v531 = vmul.f32 %v529, %v428
          %v532 = vadd.f32 %v527, %v530
          %v533 = vadd.f32 %v528, %v531
          %v534 = vstv %s350
          %v535 = vmul.f32 %v534, %v483
          %v536 = vmul.f32 %v534, %v484
          %v537 = vadd.f32 %v532, %v535
          %v538 = vadd.f32 %v533, %v536
          %v539 = vstv %s302
          %v540 = vmul.f32 %v539, %v268
          %v542 = vperm.slane %v540, 0
          %v543 = vperm.slane %v540, 1
          %v546 = vadd.f32 %v537, %v542
          %v547 = vadd.f32 %v538, %v543
          %v548 = vstv %s351
          %v549 = vmul.f32 %v548, %v269
          %v551 = vperm.slane %v549, 0
          %v552 = vperm.slane %v549, 1
          %v555 = vadd.f32 %v546, %v551
          %v556 = vadd.f32 %v547, %v552
          %v557 = vstv %s303
          %v558 = vmul.f32 %v557, %v436
          %v559 = vmul.f32 %v557, %v437
          %v560 = vadd.f32 %v555, %v558
          %v561 = vadd.f32 %v556, %v559
          %v562 = vstv %s352
          %v563 = vmul.f32 %v562, %v491
          %v564 = vmul.f32 %v562, %v492
          %v565 = vadd.f32 %v560, %v563
          %v566 = vadd.f32 %v561, %v564
          %v567 = vstv %s304
          %v568 = vmul.f32 %v567, %v445
          %v569 = vmul.f32 %v567, %v446
          %v570 = vadd.f32 %v565, %v568
          %v571 = vadd.f32 %v566, %v569
          %v572 = vstv %s353
          %v573 = vmul.f32 %v572, %v499
          %v574 = vmul.f32 %v572, %v500
          %v575 = vadd.f32 %v570, %v573
          %v576 = vadd.f32 %v571, %v574
          %v577 = vstv %s305
          %v578 = vmul.f32 %v577, %v454
          %v579 = vmul.f32 %v577, %v455
          %v580 = vadd.f32 %v575, %v578
          %v581 = vadd.f32 %v576, %v579
          %v582 = vstv %s354
          %v583 = vmul.f32 %v582, %v507
          %v584 = vmul.f32 %v582, %v508
          %v585 = vadd.f32 %v580, %v583
          %v586 = vadd.f32 %v581, %v584
          %587 = vrot.lane.b32.xlu0 %v585, 48
          %v588 = vpop.permute.xlu0 %587
          %589 = vrot.lane.b32.xlu0 %v586, 48
          %v590 = vpop.permute.xlu0 %589
          %vm591 = vcmp.lt.s32.totalorder %v271, 48
          %v592 = vsel %vm591, %v588, %v590
          %v593 = vsel %vm591, %v590, %v588
          %v594 = vsel %vm287, %v593, 0.0
          %v595 = vsel %vm288, %v592, 0.0
          %v596 = vadd.f32 %v594, 0.0
          %v597 = vadd.f32 %v595, 0.0
          %v598 = vstv %s306
          %v599 = vmul.f32 %v598, %v409
          %v600 = vmul.f32 %v598, %v410
          %v601 = vadd.f32 %v599, 0.0
          %v602 = vadd.f32 %v600, 0.0
          %v603 = vstv %s355
          %v604 = vmul.f32 %v603, %v467
          %v605 = vmul.f32 %v603, %v468
          %v606 = vadd.f32 %v601, %v604
          %v607 = vadd.f32 %v602, %v605
          %v608 = vstv %s307
          %v609 = vmul.f32 %v608, %v418
          %v610 = vmul.f32 %v608, %v419
          %v611 = vadd.f32 %v606, %v609
          %v612 = vadd.f32 %v607, %v610
          %v613 = vstv %s356
          %v614 = vmul.f32 %v613, %v475
          %v615 = vmul.f32 %v613, %v476
          %v616 = vadd.f32 %v611, %v614
          %v617 = vadd.f32 %v612, %v615
          %v618 = vstv %s308
          %v619 = vmul.f32 %v618, %v427
          %v620 = vmul.f32 %v618, %v428
          %v621 = vadd.f32 %v616, %v619
          %v622 = vadd.f32 %v617, %v620
          %v623 = vstv %s357
          %v624 = vmul.f32 %v623, %v483
          %v625 = vmul.f32 %v623, %v484
          %v626 = vadd.f32 %v621, %v624
          %v627 = vadd.f32 %v622, %v625
          %v628 = vstv %s309
          %v629 = vmul.f32 %v628, %v268
          %v631 = vperm.slane %v629, 0
          %v632 = vperm.slane %v629, 1
          %v635 = vadd.f32 %v626, %v631
          %v636 = vadd.f32 %v627, %v632
          %v637 = vstv %s358
          %v638 = vmul.f32 %v637, %v269
          %v640 = vperm.slane %v638, 0
          %v641 = vperm.slane %v638, 1
          %v644 = vadd.f32 %v635, %v640
          %v645 = vadd.f32 %v636, %v641
          %v646 = vstv %s310
          %v647 = vmul.f32 %v646, %v436
          %v648 = vmul.f32 %v646, %v437
          %v649 = vadd.f32 %v644, %v647
          %v650 = vadd.f32 %v645, %v648
          %v651 = vstv %s359
          %v652 = vmul.f32 %v651, %v491
          %v653 = vmul.f32 %v651, %v492
          %v654 = vadd.f32 %v649, %v652
          %v655 = vadd.f32 %v650, %v653
          %v656 = vstv %s311
          %v657 = vmul.f32 %v656, %v445
          %v658 = vmul.f32 %v656, %v446
          %v659 = vadd.f32 %v654, %v657
          %v660 = vadd.f32 %v655, %v658
          %v661 = vstv %s360
          %v662 = vmul.f32 %v661, %v499
          %v663 = vmul.f32 %v661, %v500
          %v664 = vadd.f32 %v659, %v662
          %v665 = vadd.f32 %v660, %v663
          %v666 = vstv %s312
          %v667 = vmul.f32 %v666, %v454
          %v668 = vmul.f32 %v666, %v455
          %v669 = vadd.f32 %v664, %v667
          %v670 = vadd.f32 %v665, %v668
          %v671 = vstv %s361
          %v672 = vmul.f32 %v671, %v507
          %v673 = vmul.f32 %v671, %v508
          %v674 = vadd.f32 %v669, %v672
          %v675 = vadd.f32 %v670, %v673
          %676 = vrot.lane.b32.xlu0 %v674, 32
          %v677 = vpop.permute.xlu0 %676
          %678 = vrot.lane.b32.xlu0 %v675, 32
          %v679 = vpop.permute.xlu0 %678
          %vm680 = vcmp.lt.s32.totalorder %v271, 32
          %v681 = vsel %vm680, %v677, %v679
          %v682 = vsel %vm680, %v679, %v677
          %v683 = vsel %vm289, %v682, 0.0
          %v684 = vsel %vm290, %v681, 0.0
          %v685 = vadd.f32 %v596, %v683
          %v686 = vadd.f32 %v597, %v684
          %v687 = vstv %s313
          %v688 = vmul.f32 %v687, %v409
          %v689 = vmul.f32 %v687, %v410
          %v690 = vadd.f32 %v688, 0.0
          %v691 = vadd.f32 %v689, 0.0
          %v692 = vstv %s362
          %v693 = vmul.f32 %v692, %v467
          %v694 = vmul.f32 %v692, %v468
          %v695 = vadd.f32 %v690, %v693
          %v696 = vadd.f32 %v691, %v694
          %v697 = vstv %s314
          %v698 = vmul.f32 %v697, %v418
          %v699 = vmul.f32 %v697, %v419
          %v700 = vadd.f32 %v695, %v698
          %v701 = vadd.f32 %v696, %v699
          %v702 = vstv %s363
          %v703 = vmul.f32 %v702, %v475
          %v704 = vmul.f32 %v702, %v476
          %v705 = vadd.f32 %v700, %v703
          %v706 = vadd.f32 %v701, %v704
          %v707 = vstv %s315
          %v708 = vmul.f32 %v707, %v427
          %v709 = vmul.f32 %v707, %v428
          %v710 = vadd.f32 %v705, %v708
          %v711 = vadd.f32 %v706, %v709
          %v712 = vstv %s364
          %v713 = vmul.f32 %v712, %v483
          %v714 = vmul.f32 %v712, %v484
          %v715 = vadd.f32 %v710, %v713
          %v716 = vadd.f32 %v711, %v714
          %v717 = vstv %s316
          %v718 = vmul.f32 %v717, %v268
          %v720 = vperm.slane %v718, 0
          %v721 = vperm.slane %v718, 1
          %v724 = vadd.f32 %v715, %v720
          %v725 = vadd.f32 %v716, %v721
          %v726 = vstv %s365
          %v727 = vmul.f32 %v726, %v269
          %v729 = vperm.slane %v727, 0
          %v730 = vperm.slane %v727, 1
          %v733 = vadd.f32 %v724, %v729
          %v734 = vadd.f32 %v725, %v730
          %v735 = vstv %s317
          %v736 = vmul.f32 %v735, %v436
          %v737 = vmul.f32 %v735, %v437
          %v738 = vadd.f32 %v733, %v736
          %v739 = vadd.f32 %v734, %v737
          %v740 = vstv %s366
          %v741 = vmul.f32 %v740, %v491
          %v742 = vmul.f32 %v740, %v492
          %v743 = vadd.f32 %v738, %v741
          %v744 = vadd.f32 %v739, %v742
          %v745 = vstv %s318
          %v746 = vmul.f32 %v745, %v445
          %v747 = vmul.f32 %v745, %v446
          %v748 = vadd.f32 %v743, %v746
          %v749 = vadd.f32 %v744, %v747
          %v750 = vstv %s367
          %v751 = vmul.f32 %v750, %v499
          %v752 = vmul.f32 %v750, %v500
          %v753 = vadd.f32 %v748, %v751
          %v754 = vadd.f32 %v749, %v752
          %v755 = vstv %s319
          %v756 = vmul.f32 %v755, %v454
          %v757 = vmul.f32 %v755, %v455
          %v758 = vadd.f32 %v753, %v756
          %v759 = vadd.f32 %v754, %v757
          %v760 = vstv %s368
          %v761 = vmul.f32 %v760, %v507
          %v762 = vmul.f32 %v760, %v508
          %v763 = vadd.f32 %v758, %v761
          %v764 = vadd.f32 %v759, %v762
          %765 = vrot.lane.b32.xlu0 %v763, 16
          %v766 = vpop.permute.xlu0 %765
          %767 = vrot.lane.b32.xlu0 %v764, 16
          %v768 = vpop.permute.xlu0 %767
          %vm769 = vcmp.lt.s32.totalorder %v271, 16
          %v770 = vsel %vm769, %v766, %v768
          %v771 = vsel %vm769, %v768, %v766
          %v772 = vsel %vm291, %v771, 0.0
          %v773 = vsel %vm292, %v770, 0.0
          %v774 = vadd.f32 %v685, %v772
          %v775 = vadd.f32 %v686, %v773
          %v776 = vstv %s320
          %v777 = vmul.f32 %v776, %v409
          %v778 = vmul.f32 %v776, %v410
          %v779 = vadd.f32 %v777, 0.0
          %v780 = vadd.f32 %v778, 0.0
          %v781 = vstv %s369
          %v782 = vmul.f32 %v781, %v467
          %v783 = vmul.f32 %v781, %v468
          %v784 = vadd.f32 %v779, %v782
          %v785 = vadd.f32 %v780, %v783
          %v786 = vstv %s321
          %v787 = vmul.f32 %v786, %v418
          %v788 = vmul.f32 %v786, %v419
          %v789 = vadd.f32 %v784, %v787
          %v790 = vadd.f32 %v785, %v788
          %v791 = vstv %s370
          %v792 = vmul.f32 %v791, %v475
          %v793 = vmul.f32 %v791, %v476
          %v794 = vadd.f32 %v789, %v792
          %v795 = vadd.f32 %v790, %v793
          %v796 = vstv %s322
          %v797 = vmul.f32 %v796, %v427
          %v798 = vmul.f32 %v796, %v428
          %v799 = vadd.f32 %v794, %v797
          %v800 = vadd.f32 %v795, %v798
          %v801 = vstv %s371
          %v802 = vmul.f32 %v801, %v483
          %v803 = vmul.f32 %v801, %v484
          %v804 = vadd.f32 %v799, %v802
          %v805 = vadd.f32 %v800, %v803
          %v806 = vstv %s323
          %v807 = vmul.f32 %v806, %v268
          %v809 = vperm.slane %v807, 0
          %v810 = vperm.slane %v807, 1
          %v813 = vadd.f32 %v804, %v809
          %v814 = vadd.f32 %v805, %v810
          %v815 = vstv %s372
          %v816 = vmul.f32 %v815, %v269
          %v818 = vperm.slane %v816, 0
          %v819 = vperm.slane %v816, 1
          %v822 = vadd.f32 %v813, %v818
          %v823 = vadd.f32 %v814, %v819
          %v824 = vstv %s324
          %v825 = vmul.f32 %v824, %v436
          %v826 = vmul.f32 %v824, %v437
          %v827 = vadd.f32 %v822, %v825
          %v828 = vadd.f32 %v823, %v826
          %v829 = vstv %s373
          %v830 = vmul.f32 %v829, %v491
          %v831 = vmul.f32 %v829, %v492
          %v832 = vadd.f32 %v827, %v830
          %v833 = vadd.f32 %v828, %v831
          %v834 = vstv %s325
          %v835 = vmul.f32 %v834, %v445
          %v836 = vmul.f32 %v834, %v446
          %v837 = vadd.f32 %v832, %v835
          %v838 = vadd.f32 %v833, %v836
          %v839 = vstv %s374
          %v840 = vmul.f32 %v839, %v499
          %v841 = vmul.f32 %v839, %v500
          %v842 = vadd.f32 %v837, %v840
          %v843 = vadd.f32 %v838, %v841
          %v844 = vstv %s326
          %v845 = vmul.f32 %v844, %v454
          %v846 = vmul.f32 %v844, %v455
          %v847 = vadd.f32 %v842, %v845
          %v848 = vadd.f32 %v843, %v846
          %v849 = vstv %s375
          %v850 = vmul.f32 %v849, %v507
          %v851 = vmul.f32 %v849, %v508
          %v852 = vadd.f32 %v847, %v850
          %v853 = vadd.f32 %v848, %v851
          %v854 = vadd.f32 %v774, %v852
          %v855 = vadd.f32 %v775, %v853
          %v856 = vstv %s327
          %v857 = vmul.f32 %v856, %v409
          %v858 = vmul.f32 %v856, %v410
          %v859 = vadd.f32 %v857, 0.0
          %v860 = vadd.f32 %v858, 0.0
          %v861 = vstv %s376
          %v862 = vmul.f32 %v861, %v467
          %v863 = vmul.f32 %v861, %v468
          %v864 = vadd.f32 %v859, %v862
          %v865 = vadd.f32 %v860, %v863
          %v866 = vstv %s328
          %v867 = vmul.f32 %v866, %v418
          %v868 = vmul.f32 %v866, %v419
          %v869 = vadd.f32 %v864, %v867
          %v870 = vadd.f32 %v865, %v868
          %v871 = vstv %s377
          %v872 = vmul.f32 %v871, %v475
          %v873 = vmul.f32 %v871, %v476
          %v874 = vadd.f32 %v869, %v872
          %v875 = vadd.f32 %v870, %v873
          %v876 = vstv %s329
          %v877 = vmul.f32 %v876, %v427
          %v878 = vmul.f32 %v876, %v428
          %v879 = vadd.f32 %v874, %v877
          %v880 = vadd.f32 %v875, %v878
          %v881 = vstv %s378
          %v882 = vmul.f32 %v881, %v483
          %v883 = vmul.f32 %v881, %v484
          %v884 = vadd.f32 %v879, %v882
          %v885 = vadd.f32 %v880, %v883
          %v886 = vstv %s330
          %v887 = vmul.f32 %v886, %v268
          %v889 = vperm.slane %v887, 0
          %v890 = vperm.slane %v887, 1
          %v893 = vadd.f32 %v884, %v889
          %v894 = vadd.f32 %v885, %v890
          %v895 = vstv %s379
          %v896 = vmul.f32 %v895, %v269
          %v898 = vperm.slane %v896, 0
          %v899 = vperm.slane %v896, 1
          %v902 = vadd.f32 %v893, %v898
          %v903 = vadd.f32 %v894, %v899
          %v904 = vstv %s331
          %v905 = vmul.f32 %v904, %v436
          %v906 = vmul.f32 %v904, %v437
          %v907 = vadd.f32 %v902, %v905
          %v908 = vadd.f32 %v903, %v906
          %v909 = vstv %s380
          %v910 = vmul.f32 %v909, %v491
          %v911 = vmul.f32 %v909, %v492
          %v912 = vadd.f32 %v907, %v910
          %v913 = vadd.f32 %v908, %v911
          %v914 = vstv %s332
          %v915 = vmul.f32 %v914, %v445
          %v916 = vmul.f32 %v914, %v446
          %v917 = vadd.f32 %v912, %v915
          %v918 = vadd.f32 %v913, %v916
          %v919 = vstv %s381
          %v920 = vmul.f32 %v919, %v499
          %v921 = vmul.f32 %v919, %v500
          %v922 = vadd.f32 %v917, %v920
          %v923 = vadd.f32 %v918, %v921
          %v924 = vstv %s333
          %v925 = vmul.f32 %v924, %v454
          %v926 = vmul.f32 %v924, %v455
          %v927 = vadd.f32 %v922, %v925
          %v928 = vadd.f32 %v923, %v926
          %v929 = vstv %s382
          %v930 = vmul.f32 %v929, %v507
          %v931 = vmul.f32 %v929, %v508
          %v932 = vadd.f32 %v927, %v930
          %v933 = vadd.f32 %v928, %v931
          %934 = vrot.lane.b32.xlu0 %v932, 112
          %v935 = vpop.permute.xlu0 %934
          %936 = vrot.lane.b32.xlu0 %v933, 112
          %v937 = vpop.permute.xlu0 %936
          %vm938 = vcmp.lt.s32.totalorder %v271, 112
          %v939 = vsel %vm938, %v935, %v937
          %v940 = vsel %vm938, %v937, %v935
          %v941 = vsel %vm293, %v939, 0.0
          %v942 = vsel %vm294, %v940, 0.0
          %v943 = vadd.f32 %v854, %v941
          %v944 = vadd.f32 %v855, %v942
          %v945 = vstv %s334
          %v946 = vmul.f32 %v945, %v409
          %v947 = vmul.f32 %v945, %v410
          %v948 = vadd.f32 %v946, 0.0
          %v949 = vadd.f32 %v947, 0.0
          %v950 = vstv %s383
          %v951 = vmul.f32 %v950, %v467
          %v952 = vmul.f32 %v950, %v468
          %v953 = vadd.f32 %v948, %v951
          %v954 = vadd.f32 %v949, %v952
          %v955 = vstv %s335
          %v956 = vmul.f32 %v955, %v418
          %v957 = vmul.f32 %v955, %v419
          %v958 = vadd.f32 %v953, %v956
          %v959 = vadd.f32 %v954, %v957
          %v960 = vstv %s384
          %v961 = vmul.f32 %v960, %v475
          %v962 = vmul.f32 %v960, %v476
          %v963 = vadd.f32 %v958, %v961
          %v964 = vadd.f32 %v959, %v962
          %v965 = vstv %s336
          %v966 = vmul.f32 %v965, %v427
          %v967 = vmul.f32 %v965, %v428
          %v968 = vadd.f32 %v963, %v966
          %v969 = vadd.f32 %v964, %v967
          %v970 = vstv %s385
          %v971 = vmul.f32 %v970, %v483
          %v972 = vmul.f32 %v970, %v484
          %v973 = vadd.f32 %v968, %v971
          %v974 = vadd.f32 %v969, %v972
          %v975 = vstv %s337
          %v976 = vmul.f32 %v975, %v268
          %v978 = vperm.slane %v976, 0
          %v979 = vperm.slane %v976, 1
          %v982 = vadd.f32 %v973, %v978
          %v983 = vadd.f32 %v974, %v979
          %v984 = vstv %s386
          %v985 = vmul.f32 %v984, %v269
          %v987 = vperm.slane %v985, 0
          %v988 = vperm.slane %v985, 1
          %v991 = vadd.f32 %v982, %v987
          %v992 = vadd.f32 %v983, %v988
          %v993 = vstv %s338
          %v994 = vmul.f32 %v993, %v436
          %v995 = vmul.f32 %v993, %v437
          %v996 = vadd.f32 %v991, %v994
          %v997 = vadd.f32 %v992, %v995
          %v998 = vstv %s387
          %v999 = vmul.f32 %v998, %v491
          %v1000 = vmul.f32 %v998, %v492
          %v1001 = vadd.f32 %v996, %v999
          %v1002 = vadd.f32 %v997, %v1000
          %v1003 = vstv %s339
          %v1004 = vmul.f32 %v1003, %v445
          %v1005 = vmul.f32 %v1003, %v446
          %v1006 = vadd.f32 %v1001, %v1004
          %v1007 = vadd.f32 %v1002, %v1005
          %v1008 = vstv %s388
          %v1009 = vmul.f32 %v1008, %v499
          %v1010 = vmul.f32 %v1008, %v500
          %v1011 = vadd.f32 %v1006, %v1009
          %v1012 = vadd.f32 %v1007, %v1010
          %v1013 = vstv %s340
          %v1014 = vmul.f32 %v1013, %v454
          %v1015 = vmul.f32 %v1013, %v455
          %v1016 = vadd.f32 %v1011, %v1014
          %v1017 = vadd.f32 %v1012, %v1015
          %v1018 = vstv %s389
          %v1019 = vmul.f32 %v1018, %v507
          %v1020 = vmul.f32 %v1018, %v508
          %v1021 = vadd.f32 %v1016, %v1019
          %v1022 = vadd.f32 %v1017, %v1020
          %1023 = vrot.lane.b32.xlu0 %v1021, 96
          %v1024 = vpop.permute.xlu0 %1023
          %1025 = vrot.lane.b32.xlu0 %v1022, 96
          %v1026 = vpop.permute.xlu0 %1025
          %vm1027 = vcmp.lt.s32.totalorder %v271, 96
          %v1028 = vsel %vm1027, %v1024, %v1026
          %v1029 = vsel %vm1027, %v1026, %v1024
          %v1030 = vsel %vm295, %v1028, 0.0
          %v1031 = vsel %vm296, %v1029, 0.0
          %v1032 = vadd.f32 %v943, %v1030
          %v1033 = vadd.f32 %v944, %v1031
          %v1034 = vstv %s341
          %v1035 = vmul.f32 %v1034, %v409
          %v1036 = vmul.f32 %v1034, %v410
          %v1037 = vadd.f32 %v1035, 0.0
          %v1038 = vadd.f32 %v1036, 0.0
          %v1039 = vstv %s390
          %v1040 = vmul.f32 %v1039, %v467
          %v1041 = vmul.f32 %v1039, %v468
          %v1042 = vadd.f32 %v1037, %v1040
          %v1043 = vadd.f32 %v1038, %v1041
          %v1044 = vstv %s342
          %v1045 = vmul.f32 %v1044, %v418
          %v1046 = vmul.f32 %v1044, %v419
          %v1047 = vadd.f32 %v1042, %v1045
          %v1048 = vadd.f32 %v1043, %v1046
          %v1049 = vstv %s391
          %v1050 = vmul.f32 %v1049, %v475
          %v1051 = vmul.f32 %v1049, %v476
          %v1052 = vadd.f32 %v1047, %v1050
          %v1053 = vadd.f32 %v1048, %v1051
          %v1054 = vstv %s343
          %v1055 = vmul.f32 %v1054, %v427
          %v1056 = vmul.f32 %v1054, %v428
          %v1057 = vadd.f32 %v1052, %v1055
          %v1058 = vadd.f32 %v1053, %v1056
          %v1059 = vstv %s392
          %v1060 = vmul.f32 %v1059, %v483
          %v1061 = vmul.f32 %v1059, %v484
          %v1062 = vadd.f32 %v1057, %v1060
          %v1063 = vadd.f32 %v1058, %v1061
          %v1064 = vstv %s344
          %v1065 = vmul.f32 %v1064, %v268
          %v1067 = vperm.slane %v1065, 0
          %v1068 = vperm.slane %v1065, 1
          %v1071 = vadd.f32 %v1062, %v1067
          %v1072 = vadd.f32 %v1063, %v1068
          %v1073 = vstv %s393
          %v1074 = vmul.f32 %v1073, %v269
          %v1076 = vperm.slane %v1074, 0
          %v1077 = vperm.slane %v1074, 1
          %v1080 = vadd.f32 %v1071, %v1076
          %v1081 = vadd.f32 %v1072, %v1077
          %v1082 = vstv %s345
          %v1083 = vmul.f32 %v1082, %v436
          %v1084 = vmul.f32 %v1082, %v437
          %v1085 = vadd.f32 %v1080, %v1083
          %v1086 = vadd.f32 %v1081, %v1084
          %v1087 = vstv %s394
          %v1088 = vmul.f32 %v1087, %v491
          %v1089 = vmul.f32 %v1087, %v492
          %v1090 = vadd.f32 %v1085, %v1088
          %v1091 = vadd.f32 %v1086, %v1089
          %v1092 = vstv %s346
          %v1093 = vmul.f32 %v1092, %v445
          %v1094 = vmul.f32 %v1092, %v446
          %v1095 = vadd.f32 %v1090, %v1093
          %v1096 = vadd.f32 %v1091, %v1094
          %v1097 = vstv %s395
          %v1098 = vmul.f32 %v1097, %v499
          %v1099 = vmul.f32 %v1097, %v500
          %v1100 = vadd.f32 %v1095, %v1098
          %v1101 = vadd.f32 %v1096, %v1099
          %v1102 = vstv %s347
          %v1103 = vmul.f32 %v1102, %v454
          %v1104 = vmul.f32 %v1102, %v455
          %v1105 = vadd.f32 %v1100, %v1103
          %v1106 = vadd.f32 %v1101, %v1104
          %v1107 = vstv %s396
          %v1108 = vmul.f32 %v1107, %v507
          %v1109 = vmul.f32 %v1107, %v508
          %v1110 = vadd.f32 %v1105, %v1108
          %v1111 = vadd.f32 %v1106, %v1109
          %1112 = vrot.lane.b32.xlu0 %v1110, 80
          %v1113 = vpop.permute.xlu0 %1112
          %1114 = vrot.lane.b32.xlu0 %v1111, 80
          %v1115 = vpop.permute.xlu0 %1114
          %vm1116 = vcmp.lt.s32.totalorder %v271, 80
          %v1117 = vsel %vm1116, %v1113, %v1115
          %v1118 = vsel %vm1116, %v1115, %v1113
          %v1119 = vsel %vm297, %v1117, 0.0
          %v1120 = vsel %vm298, %v1118, 0.0
          %v1121 = vadd.f32 %v1032, %v1119
          %v1122 = vadd.f32 %v1033, %v1120
          %v1123 = vsub.f32 0.0, %v1121
          %v1124 = vsub.f32 0.0, %v1122
          %v1125 = vmul.f32 %v1123, 1.442695
          %v1126 = vpow.pop %v1125
          %v1127 = vmul.f32 %v1124, 1.442695
          %v1128 = vpow.pop %v1127
          %v1129 = vadd.f32 %v1126, 1.0
          %v1130 = vadd.f32 %v1128, 1.0
          %v1131 = vrcp.pop %v1129
          %v1132 = vrcp.pop %v1130
          %v1133 = vmul.f32 %v1121, %v1131
          %v1134 = vmul.f32 %v1122, %v1132
          %v1137 = vrot.slane %v1134, 7
          %v1138 = vsel %vm228, %v1133, %v1137
          %1140 = vst.msk [vmem:[%s191] sm:$0x3] %vm235, %v1138
        $region44: #{tpu_custom_call.1} parent=27 // pred_fallthru
          _
        %s1141 = sand.u32 %s89, 1
        %s1142 = scalar_lea.sflag [#allocation6], %s1141
        %s1143 = sand.u32 %s89, 1
        %s1144 = smul.addr %s1143, 2
        %s1145 = scalar_lea.vmem [#allocation9], %s1144
        // Predicated region
        $region45: #{tpu_custom_call.1} parent=27 // pred_check
          %p1146 = pneg %p99
        $region46: #{tpu_custom_call.1} parent=27 // pred_check_branch
          %1148 = sbr.rel (%p1146) target = $region48
        $region47: #{tpu_custom_call.1} parent=27 // pred_region
          %1150 = vsyncadd %s1142, 0
          %s1151 = smul.addr %s24, 2
          %s1152 = scalar_lea.hbm %s2, %s1151
          %s1154 = sshll.u32 %s1145, 4
          %s1155 = int_to_ptr.vmem [resolvable:$true] %s1154
          %s1156 = sshll.u32 %s1152, 4
          %s1157 = int_to_ptr.hbm [resolvable:$true] %s1156
          %1159 = dma.vmem_to_hbm [thread:$0]  %s1155, 32, %s1157, %s1142
        $region48: #{tpu_custom_call.1} parent=27 // pred_fallthru
          _
      $region28: #{tpu_custom_call.1} parent=5 // pred_fallthru
        _
      %p1160 = scmp.le.s32.totalorder 2, %s15
      // Predicated region
      $region49: #{tpu_custom_call.1} parent=5 // pred_check
        %p1161 = pneg %p1160
      $region50: #{tpu_custom_call.1} parent=5 // pred_check_branch
        %1163 = sbr.rel (%p1161) target = $region52
      $region51: #{tpu_custom_call.1} parent=5 // pred_region
        %s1164 = ssub.s32 %s15, 2
        // Predicated region
        $region53: #{tpu_custom_call.1} parent=51 // pred_check
          %p1165 = pneg %p105
        $region54: #{tpu_custom_call.1} parent=51 // pred_check_branch
          %1167 = sbr.rel (%p1165) target = $region56
        $region55: #{tpu_custom_call.1} parent=51 // pred_region
          %s1168 = sand.u32 %s90, 1
          %s1169 = scalar_lea.sflag [#allocation6], %s1168
          %s1170 = sand.u32 %s90, 1
          %s1171 = smul.addr %s1170, 2
          %s1172 = scalar_lea.vmem [#allocation9], %s1171
          %1174 = dma.done %s1169, 32
        $region56: #{tpu_custom_call.1} parent=51 // pred_fallthru
          _
      $region52: #{tpu_custom_call.1} parent=5 // pred_fallthru
        _
    $region6: #{tpu_custom_call.1} parent=1 // loop_footer
      %s19 = sadd.s32 1, %s15
    $region7: #{tpu_custom_call.1} parent=1 // loop_footer_branch
      %14 = sbr.rel target = $region3
    $region8: #{tpu_custom_call.1} parent=1 // loop_exit
      _
    %1175 = vsyncpa [#allocation5], 1
    %s1176 = scalar_lea.sflag [#allocation5], 1
    %1177 = vsyncpa %s1176, 1
    %1178 = vsyncpa [#allocation6], 1
    %s1179 = scalar_lea.sflag [#allocation6], 1
    %1180 = vsyncpa %s1179, 1
    %1181 = vsyncpa [#allocation7], 1
    %s1182 = scalar_lea.sflag [#allocation7], 1
    %1183 = vsyncpa %s1182, 1

</llo_original>
